<compile_context>
chip_gen: v6e
topology: v6e:2x2x1
jax: 0.10.0
libtpu: 0.0.40
codegen_flags: <defaults>
</compile_context>

<pallas_src>
import functools

import jax
import jax.numpy as jnp
from jax import lax
from jax.experimental import pallas as pl
from jax.experimental.pallas import tpu as pltpu


def _round_up(x, m):
    return (x + m - 1) // m * m


def _lstm_kernel(x_ref, wih_ref, whh_ref, b_ref, h_out_ref,
                 *, seq_len, batch_p, input_dim):
    """Single-invocation LSTM recurrence.

    x_ref   : (T*Bp, I)    time-major input, batch padded to Bp sublanes
    wih_ref : (I, 4*Hp)    W_ih^T, each gate zero-padded to Hp (128) lanes
    whh_ref : (Hp, 4*Hp)   W_hh^T, gate-padded; extra rows/cols are zero
    b_ref   : (1, 4*Hp)    b_ih + b_hh, gate-padded
    h_out   : (Bp, Hp)     final hidden state h_T (padded)
    """
    Hp = whh_ref.shape[0]
    rows = seq_len * batch_p

    # --- Input projection for ALL timesteps, kept as a live value (no VMEM
    #     scratch round-trip).  I is tiny, so do it on the VPU as broadcast
    #     FMAs; for larger I fall back to a single MXU matmul.
    if input_dim <= 8:
        gx = jnp.broadcast_to(b_ref[...], (rows, 4 * Hp))
        for k in range(input_dim):
            gx = gx + x_ref[:, k:k + 1] * wih_ref[k:k + 1, :]
    else:
        gx = (jnp.dot(x_ref[...], wih_ref[...],
                      preferred_element_type=jnp.float32) + b_ref[...])

    # --- Timestep 0 peeled: h0 = c0 = 0 -> no h @ W_hh^T, no f-gate term.
    g0 = gx[0:batch_p, :]
    i_g = jax.nn.sigmoid(g0[:, 0 * Hp:1 * Hp])
    g_g = jnp.tanh(g0[:, 2 * Hp:3 * Hp])
    o_g = jax.nn.sigmoid(g0[:, 3 * Hp:4 * Hp])
    c = i_g * g_g
    h = o_g * jnp.tanh(c)

    # --- Remaining steps, fully unrolled (seq_len small & static); h/c and
    #     gx stay in vregs, gate slices are 128-lane aligned.
    for t in range(1, seq_len):
        gates = gx[t * batch_p:(t + 1) * batch_p, :] + jnp.dot(
            h, whh_ref[...], preferred_element_type=jnp.float32)
        i_g = jax.nn.sigmoid(gates[:, 0 * Hp:1 * Hp])
        f_g = jax.nn.sigmoid(gates[:, 1 * Hp:2 * Hp])
        g_g = jnp.tanh(gates[:, 2 * Hp:3 * Hp])
        o_g = jax.nn.sigmoid(gates[:, 3 * Hp:4 * Hp])
        c = f_g * c + i_g * g_g
        h = o_g * jnp.tanh(c)

    h_out_ref[...] = h


def _pad_gate_cols(w, H, Hp):
    """w: (..., 4H) gate-stacked (i,f,g,o) -> (..., 4Hp); each gate zero-padded
    from H to Hp columns so every gate occupies a whole 128-lane block."""
    if Hp == H:
        return w
    pad = [(0, 0)] * (w.ndim - 1) + [(0, Hp - H)]
    parts = [jnp.pad(w[..., k * H:(k + 1) * H], pad) for k in range(4)]
    return jnp.concatenate(parts, axis=-1)


def pack_lstm_weights(w_ih, w_hh, b_ih, b_hh):
    """One-time (model-load-time) weight packing. NOT on the per-call path."""
    H = w_hh.shape[1]
    Hp = _round_up(H, 128)
    wih_p = _pad_gate_cols(jnp.transpose(w_ih).astype(jnp.float32), H, Hp)   # (I, 4Hp)
    whh_p = _pad_gate_cols(jnp.transpose(w_hh).astype(jnp.float32), H, Hp)   # (H, 4Hp)
    whh_p = jnp.pad(whh_p, ((0, Hp - H), (0, 0)))                            # (Hp, 4Hp)
    bias_p = _pad_gate_cols(
        (b_ih + b_hh).astype(jnp.float32).reshape(1, 4 * H), H, Hp)          # (1, 4Hp)
    return wih_p, whh_p, bias_p


@functools.partial(jax.jit, static_argnums=(4,))
def lstm_encoder_forward(x_seq, wih_p, whh_p, bias_p, hidden_dim):
    """x_seq: (B, T, I) float32; packed weights from pack_lstm_weights.
    Returns h_T: (B, hidden_dim) float32 (== h.squeeze(0))."""
    B, T, I = x_seq.shape
    Hp = whh_p.shape[0]
    Bp = _round_up(B, 8)

    # Per-call prep is only the input reshape: time-major, batch-padded,
    # flattened to (T*Bp, I).
    x_tm = jnp.transpose(x_seq, (1, 0, 2)).astype(jnp.float32)   # (T, B, I)
    x_tm = jnp.pad(x_tm, ((0, 0), (0, Bp - B), (0, 0)))          # (T, Bp, I)
    x_tm = x_tm.reshape(T * Bp, I)

    kernel = functools.partial(_lstm_kernel, seq_len=T, batch_p=Bp, input_dim=I)

    h_p = pl.pallas_call(
        kernel,
        out_shape=jax.ShapeDtypeStruct((Bp, Hp), jnp.float32),
        grid_spec=pltpu.PrefetchScalarGridSpec(
            num_scalar_prefetch=0,
            grid=(1,),  # single invocation: whole problem resident in VMEM (<1 MiB)
            in_specs=[
                pl.BlockSpec((T * Bp, I), lambda i: (0, 0)),    # x (time-major, flat)
                pl.BlockSpec((I, 4 * Hp), lambda i: (0, 0)),    # W_ih^T (gate-padded)
                pl.BlockSpec((Hp, 4 * Hp), lambda i: (0, 0)),   # W_hh^T (gate-padded)
                pl.BlockSpec((1, 4 * Hp), lambda i: (0, 0)),    # fused bias
            ],
            out_specs=pl.BlockSpec((Bp, Hp), lambda i: (0, 0)),  # h_T (padded)
        ),
        compiler_params=pltpu.CompilerParams(
            # Serial recurrence at B=4 can't use a second core; if batch grows,
            # add a leading "parallel" batch-tile axis for v7x megacore.
            dimension_semantics=("arbitrary",),
        ),
    )(x_tm, wih_p, whh_p, bias_p)

    return h_p[:B, :hidden_dim]


def lstm_encoder_reference(x_seq, w_ih, w_hh, b_ih, b_hh):
    """Pure-JAX reference with identical PyTorch LSTM semantics."""
    B, T, I = x_seq.shape
    H = w_hh.shape[1]
    bias = b_ih + b_hh

    def step(carry, x_t):
        h, c = carry
        gates = x_t @ w_ih.T + h @ w_hh.T + bias
        i_g = jax.nn.sigmoid(gates[:, 0 * H:1 * H])
        f_g = jax.nn.sigmoid(gates[:, 1 * H:2 * H])
        g_g = jnp.tanh(gates[:, 2 * H:3 * H])
        o_g = jax.nn.sigmoid(gates[:, 3 * H:4 * H])
        c = f_g * c + i_g * g_g
        h = o_g * jnp.tanh(c)
        return (h, c), None

    h0 = jnp.zeros((B, H), jnp.float32)
    c0 = jnp.zeros((B, H), jnp.float32)
    (h_T, _), _ = lax.scan(step, (h0, c0), jnp.transpose(x_seq, (1, 0, 2)))
    return h_T


if __name__ == "__main__":
    INPUT_DIM, HIDDEN_DIM = 2, 64
    B, T = 4, 8

    key = jax.random.PRNGKey(0)
    k_x, k_wih, k_whh, k_bih, k_bhh = jax.random.split(key, 5)

    # PyTorch-style uniform(-1/sqrt(H), 1/sqrt(H)) init, deterministic.
    bound = 1.0 / jnp.sqrt(jnp.float32(HIDDEN_DIM))
    w_ih = jax.random.uniform(k_wih, (4 * HIDDEN_DIM, INPUT_DIM), jnp.float32, -bound, bound)
    w_hh = jax.random.uniform(k_whh, (4 * HIDDEN_DIM, HIDDEN_DIM), jnp.float32, -bound, bound)
    b_ih = jax.random.uniform(k_bih, (4 * HIDDEN_DIM,), jnp.float32, -bound, bound)
    b_hh = jax.random.uniform(k_bhh, (4 * HIDDEN_DIM,), jnp.float32, -bound, bound)

    x_seq = jax.random.normal(k_x, (B, T, INPUT_DIM), jnp.float32)

    # One-time weight packing (model-load time) — off the per-call path.
    wih_p, whh_p, bias_p = jax.block_until_ready(
        pack_lstm_weights(w_ih, w_hh, b_ih, b_hh))

    h_kernel = jax.block_until_ready(
        lstm_encoder_forward(x_seq, wih_p, whh_p, bias_p, HIDDEN_DIM))
    h_ref = jax.block_until_ready(
        lstm_encoder_reference(x_seq, w_ih, w_hh, b_ih, b_hh))

    assert h_kernel.shape == (B, HIDDEN_DIM)
    assert jnp.allclose(h_kernel, h_ref, atol=1e-5, rtol=1e-5), "mismatch vs reference"
    print("KERNEL_OK")
</pallas_src>

<mosaic_0001>
module attributes {stable_mosaic.version = 11 : i64} {
  func.func @_lstm_kernel(%arg0: i32, %arg1: memref<64x2xf32, #tpu.memory_space<vmem>>, %arg2: memref<2x512xf32, #tpu.memory_space<vmem>>, %arg3: memref<128x512xf32, #tpu.memory_space<vmem>>, %arg4: memref<1x512xf32, #tpu.memory_space<vmem>>, %arg5: memref<8x128xf32, #tpu.memory_space<vmem>>) attributes {dimension_semantics = [#tpu.dimension_semantics<arbitrary>], iteration_bounds = array<i64: 1>, scalar_prefetch = 0 : i64, scratch_operands = 0 : i64, tpu.core_type = #tpu.core_type<tc>, window_params = [{pipeline_mode = #tpu.pipeline_mode<synchronous>, transform_indices = @transform_0, window_bounds = array<i64: 64, 2>}, {pipeline_mode = #tpu.pipeline_mode<synchronous>, transform_indices = @transform_1, window_bounds = array<i64: 2, 512>}, {pipeline_mode = #tpu.pipeline_mode<synchronous>, transform_indices = @transform_2, window_bounds = array<i64: 128, 512>}, {pipeline_mode = #tpu.pipeline_mode<synchronous>, transform_indices = @transform_3, window_bounds = array<i64: 1, 512>}, {pipeline_mode = #tpu.pipeline_mode<synchronous>, transform_indices = @transform_4, window_bounds = array<i64: 8, 128>}]} {
    %c0 = arith.constant 0 : index
    %c0_0 = arith.constant 0 : index
    %0 = vector.load %arg4[%c0, %c0_0] : memref<1x512xf32, #tpu.memory_space<vmem>>, vector<1x512xf32>
    %1 = vector.shape_cast %0 : vector<1x512xf32> to vector<1x512xf32>
    %2 = vector.broadcast %1 : vector<1x512xf32> to vector<64x512xf32>
    %c0_1 = arith.constant 0 : index
    %c0_2 = arith.constant 0 : index
    %3 = vector.load %arg1[%c0_1, %c0_2] : memref<64x2xf32, #tpu.memory_space<vmem>>, vector<64x1xf32>
    %c0_3 = arith.constant 0 : index
    %c0_4 = arith.constant 0 : index
    %4 = vector.load %arg2[%c0_3, %c0_4] : memref<2x512xf32, #tpu.memory_space<vmem>>, vector<1x512xf32>
    %5 = vector.broadcast %3 : vector<64x1xf32> to vector<64x512xf32>
    %6 = vector.broadcast %4 : vector<1x512xf32> to vector<64x512xf32>
    %7 = arith.mulf %5, %6 : vector<64x512xf32>
    %8 = arith.addf %2, %7 : vector<64x512xf32>
    %c0_5 = arith.constant 0 : index
    %c1 = arith.constant 1 : index
    %9 = vector.load %arg1[%c0_5, %c1] : memref<64x2xf32, #tpu.memory_space<vmem>>, vector<64x1xf32>
    %c1_6 = arith.constant 1 : index
    %c0_7 = arith.constant 0 : index
    %10 = vector.load %arg2[%c1_6, %c0_7] : memref<2x512xf32, #tpu.memory_space<vmem>>, vector<1x512xf32>
    %11 = vector.broadcast %9 : vector<64x1xf32> to vector<64x512xf32>
    %12 = vector.broadcast %10 : vector<1x512xf32> to vector<64x512xf32>
    %13 = arith.mulf %11, %12 : vector<64x512xf32>
    %14 = arith.addf %8, %13 : vector<64x512xf32>
    %15 = vector.extract_strided_slice %14 {offsets = [0, 0], sizes = [8, 512], strides = [1, 1]} : vector<64x512xf32> to vector<8x512xf32>
    %16 = vector.extract_strided_slice %15 {offsets = [0, 0], sizes = [8, 128], strides = [1, 1]} : vector<8x512xf32> to vector<8x128xf32>
    %17 = arith.negf %16 : vector<8x128xf32>
    %18 = math.exp %17 : vector<8x128xf32>
    %cst = arith.constant 1.000000e+00 : f32
    %19 = vector.broadcast %cst : f32 to vector<8x128xf32>
    %20 = arith.addf %19, %18 : vector<8x128xf32>
    %21 = arith.divf %19, %20 : vector<8x128xf32>
    %22 = vector.extract_strided_slice %15 {offsets = [0, 256], sizes = [8, 128], strides = [1, 1]} : vector<8x512xf32> to vector<8x128xf32>
    %23 = math.tanh %22 : vector<8x128xf32>
    %24 = vector.extract_strided_slice %15 {offsets = [0, 384], sizes = [8, 128], strides = [1, 1]} : vector<8x512xf32> to vector<8x128xf32>
    %25 = arith.negf %24 : vector<8x128xf32>
    %26 = math.exp %25 : vector<8x128xf32>
    %cst_8 = arith.constant 1.000000e+00 : f32
    %27 = vector.broadcast %cst_8 : f32 to vector<8x128xf32>
    %28 = arith.addf %27, %26 : vector<8x128xf32>
    %29 = arith.divf %27, %28 : vector<8x128xf32>
    %30 = arith.mulf %21, %23 : vector<8x128xf32>
    %31 = math.tanh %30 : vector<8x128xf32>
    %32 = arith.mulf %29, %31 : vector<8x128xf32>
    %33 = vector.extract_strided_slice %14 {offsets = [8, 0], sizes = [8, 512], strides = [1, 1]} : vector<64x512xf32> to vector<8x512xf32>
    %c0_9 = arith.constant 0 : index
    %c0_10 = arith.constant 0 : index
    %34 = vector.load %arg3[%c0_9, %c0_10] : memref<128x512xf32, #tpu.memory_space<vmem>>, vector<128x512xf32>
    %cst_11 = arith.constant dense<0.000000e+00> : vector<8x512xf32>
    %35 = tpu.matmul %32, %34, %cst_11 {dimension_numbers = #tpu.dot_dimension_numbers<[1], [0], [0], [1], [0, 0, 1, 1], [], []>} : vector<8x128xf32>, vector<128x512xf32>, vector<8x512xf32> -> vector<8x512xf32>
    %36 = arith.addf %33, %35 : vector<8x512xf32>
    %37 = vector.extract_strided_slice %36 {offsets = [0, 0], sizes = [8, 128], strides = [1, 1]} : vector<8x512xf32> to vector<8x128xf32>
    %38 = arith.negf %37 : vector<8x128xf32>
    %39 = math.exp %38 : vector<8x128xf32>
    %cst_12 = arith.constant 1.000000e+00 : f32
    %40 = vector.broadcast %cst_12 : f32 to vector<8x128xf32>
    %41 = arith.addf %40, %39 : vector<8x128xf32>
    %42 = arith.divf %40, %41 : vector<8x128xf32>
    %43 = vector.extract_strided_slice %36 {offsets = [0, 128], sizes = [8, 128], strides = [1, 1]} : vector<8x512xf32> to vector<8x128xf32>
    %44 = arith.negf %43 : vector<8x128xf32>
    %45 = math.exp %44 : vector<8x128xf32>
    %cst_13 = arith.constant 1.000000e+00 : f32
    %46 = vector.broadcast %cst_13 : f32 to vector<8x128xf32>
    %47 = arith.addf %46, %45 : vector<8x128xf32>
    %48 = arith.divf %46, %47 : vector<8x128xf32>
    %49 = vector.extract_strided_slice %36 {offsets = [0, 256], sizes = [8, 128], strides = [1, 1]} : vector<8x512xf32> to vector<8x128xf32>
    %50 = math.tanh %49 : vector<8x128xf32>
    %51 = vector.extract_strided_slice %36 {offsets = [0, 384], sizes = [8, 128], strides = [1, 1]} : vector<8x512xf32> to vector<8x128xf32>
    %52 = arith.negf %51 : vector<8x128xf32>
    %53 = math.exp %52 : vector<8x128xf32>
    %cst_14 = arith.constant 1.000000e+00 : f32
    %54 = vector.broadcast %cst_14 : f32 to vector<8x128xf32>
    %55 = arith.addf %54, %53 : vector<8x128xf32>
    %56 = arith.divf %54, %55 : vector<8x128xf32>
    %57 = arith.mulf %48, %30 : vector<8x128xf32>
    %58 = arith.mulf %42, %50 : vector<8x128xf32>
    %59 = arith.addf %57, %58 : vector<8x128xf32>
    %60 = math.tanh %59 : vector<8x128xf32>
    %61 = arith.mulf %56, %60 : vector<8x128xf32>
    %62 = vector.extract_strided_slice %14 {offsets = [16, 0], sizes = [8, 512], strides = [1, 1]} : vector<64x512xf32> to vector<8x512xf32>
    %c0_15 = arith.constant 0 : index
    %c0_16 = arith.constant 0 : index
    %63 = vector.load %arg3[%c0_15, %c0_16] : memref<128x512xf32, #tpu.memory_space<vmem>>, vector<128x512xf32>
    %cst_17 = arith.constant dense<0.000000e+00> : vector<8x512xf32>
    %64 = tpu.matmul %61, %63, %cst_17 {dimension_numbers = #tpu.dot_dimension_numbers<[1], [0], [0], [1], [0, 0, 1, 1], [], []>} : vector<8x128xf32>, vector<128x512xf32>, vector<8x512xf32> -> vector<8x512xf32>
    %65 = arith.addf %62, %64 : vector<8x512xf32>
    %66 = vector.extract_strided_slice %65 {offsets = [0, 0], sizes = [8, 128], strides = [1, 1]} : vector<8x512xf32> to vector<8x128xf32>
    %67 = arith.negf %66 : vector<8x128xf32>
    %68 = math.exp %67 : vector<8x128xf32>
    %cst_18 = arith.constant 1.000000e+00 : f32
    %69 = vector.broadcast %cst_18 : f32 to vector<8x128xf32>
    %70 = arith.addf %69, %68 : vector<8x128xf32>
    %71 = arith.divf %69, %70 : vector<8x128xf32>
    %72 = vector.extract_strided_slice %65 {offsets = [0, 128], sizes = [8, 128], strides = [1, 1]} : vector<8x512xf32> to vector<8x128xf32>
    %73 = arith.negf %72 : vector<8x128xf32>
    %74 = math.exp %73 : vector<8x128xf32>
    %cst_19 = arith.constant 1.000000e+00 : f32
    %75 = vector.broadcast %cst_19 : f32 to vector<8x128xf32>
    %76 = arith.addf %75, %74 : vector<8x128xf32>
    %77 = arith.divf %75, %76 : vector<8x128xf32>
    %78 = vector.extract_strided_slice %65 {offsets = [0, 256], sizes = [8, 128], strides = [1, 1]} : vector<8x512xf32> to vector<8x128xf32>
    %79 = math.tanh %78 : vector<8x128xf32>
    %80 = vector.extract_strided_slice %65 {offsets = [0, 384], sizes = [8, 128], strides = [1, 1]} : vector<8x512xf32> to vector<8x128xf32>
    %81 = arith.negf %80 : vector<8x128xf32>
    %82 = math.exp %81 : vector<8x128xf32>
    %cst_20 = arith.constant 1.000000e+00 : f32
    %83 = vector.broadcast %cst_20 : f32 to vector<8x128xf32>
    %84 = arith.addf %83, %82 : vector<8x128xf32>
    %85 = arith.divf %83, %84 : vector<8x128xf32>
    %86 = arith.mulf %77, %59 : vector<8x128xf32>
    %87 = arith.mulf %71, %79 : vector<8x128xf32>
    %88 = arith.addf %86, %87 : vector<8x128xf32>
    %89 = math.tanh %88 : vector<8x128xf32>
    %90 = arith.mulf %85, %89 : vector<8x128xf32>
    %91 = vector.extract_strided_slice %14 {offsets = [24, 0], sizes = [8, 512], strides = [1, 1]} : vector<64x512xf32> to vector<8x512xf32>
    %c0_21 = arith.constant 0 : index
    %c0_22 = arith.constant 0 : index
    %92 = vector.load %arg3[%c0_21, %c0_22] : memref<128x512xf32, #tpu.memory_space<vmem>>, vector<128x512xf32>
    %cst_23 = arith.constant dense<0.000000e+00> : vector<8x512xf32>
    %93 = tpu.matmul %90, %92, %cst_23 {dimension_numbers = #tpu.dot_dimension_numbers<[1], [0], [0], [1], [0, 0, 1, 1], [], []>} : vector<8x128xf32>, vector<128x512xf32>, vector<8x512xf32> -> vector<8x512xf32>
    %94 = arith.addf %91, %93 : vector<8x512xf32>
    %95 = vector.extract_strided_slice %94 {offsets = [0, 0], sizes = [8, 128], strides = [1, 1]} : vector<8x512xf32> to vector<8x128xf32>
    %96 = arith.negf %95 : vector<8x128xf32>
    %97 = math.exp %96 : vector<8x128xf32>
    %cst_24 = arith.constant 1.000000e+00 : f32
    %98 = vector.broadcast %cst_24 : f32 to vector<8x128xf32>
    %99 = arith.addf %98, %97 : vector<8x128xf32>
    %100 = arith.divf %98, %99 : vector<8x128xf32>
    %101 = vector.extract_strided_slice %94 {offsets = [0, 128], sizes = [8, 128], strides = [1, 1]} : vector<8x512xf32> to vector<8x128xf32>
    %102 = arith.negf %101 : vector<8x128xf32>
    %103 = math.exp %102 : vector<8x128xf32>
    %cst_25 = arith.constant 1.000000e+00 : f32
    %104 = vector.broadcast %cst_25 : f32 to vector<8x128xf32>
    %105 = arith.addf %104, %103 : vector<8x128xf32>
    %106 = arith.divf %104, %105 : vector<8x128xf32>
    %107 = vector.extract_strided_slice %94 {offsets = [0, 256], sizes = [8, 128], strides = [1, 1]} : vector<8x512xf32> to vector<8x128xf32>
    %108 = math.tanh %107 : vector<8x128xf32>
    %109 = vector.extract_strided_slice %94 {offsets = [0, 384], sizes = [8, 128], strides = [1, 1]} : vector<8x512xf32> to vector<8x128xf32>
    %110 = arith.negf %109 : vector<8x128xf32>
    %111 = math.exp %110 : vector<8x128xf32>
    %cst_26 = arith.constant 1.000000e+00 : f32
    %112 = vector.broadcast %cst_26 : f32 to vector<8x128xf32>
    %113 = arith.addf %112, %111 : vector<8x128xf32>
    %114 = arith.divf %112, %113 : vector<8x128xf32>
    %115 = arith.mulf %106, %88 : vector<8x128xf32>
    %116 = arith.mulf %100, %108 : vector<8x128xf32>
    %117 = arith.addf %115, %116 : vector<8x128xf32>
    %118 = math.tanh %117 : vector<8x128xf32>
    %119 = arith.mulf %114, %118 : vector<8x128xf32>
    %120 = vector.extract_strided_slice %14 {offsets = [32, 0], sizes = [8, 512], strides = [1, 1]} : vector<64x512xf32> to vector<8x512xf32>
    %c0_27 = arith.constant 0 : index
    %c0_28 = arith.constant 0 : index
    %121 = vector.load %arg3[%c0_27, %c0_28] : memref<128x512xf32, #tpu.memory_space<vmem>>, vector<128x512xf32>
    %cst_29 = arith.constant dense<0.000000e+00> : vector<8x512xf32>
    %122 = tpu.matmul %119, %121, %cst_29 {dimension_numbers = #tpu.dot_dimension_numbers<[1], [0], [0], [1], [0, 0, 1, 1], [], []>} : vector<8x128xf32>, vector<128x512xf32>, vector<8x512xf32> -> vector<8x512xf32>
    %123 = arith.addf %120, %122 : vector<8x512xf32>
    %124 = vector.extract_strided_slice %123 {offsets = [0, 0], sizes = [8, 128], strides = [1, 1]} : vector<8x512xf32> to vector<8x128xf32>
    %125 = arith.negf %124 : vector<8x128xf32>
    %126 = math.exp %125 : vector<8x128xf32>
    %cst_30 = arith.constant 1.000000e+00 : f32
    %127 = vector.broadcast %cst_30 : f32 to vector<8x128xf32>
    %128 = arith.addf %127, %126 : vector<8x128xf32>
    %129 = arith.divf %127, %128 : vector<8x128xf32>
    %130 = vector.extract_strided_slice %123 {offsets = [0, 128], sizes = [8, 128], strides = [1, 1]} : vector<8x512xf32> to vector<8x128xf32>
    %131 = arith.negf %130 : vector<8x128xf32>
    %132 = math.exp %131 : vector<8x128xf32>
    %cst_31 = arith.constant 1.000000e+00 : f32
    %133 = vector.broadcast %cst_31 : f32 to vector<8x128xf32>
    %134 = arith.addf %133, %132 : vector<8x128xf32>
    %135 = arith.divf %133, %134 : vector<8x128xf32>
    %136 = vector.extract_strided_slice %123 {offsets = [0, 256], sizes = [8, 128], strides = [1, 1]} : vector<8x512xf32> to vector<8x128xf32>
    %137 = math.tanh %136 : vector<8x128xf32>
    %138 = vector.extract_strided_slice %123 {offsets = [0, 384], sizes = [8, 128], strides = [1, 1]} : vector<8x512xf32> to vector<8x128xf32>
    %139 = arith.negf %138 : vector<8x128xf32>
    %140 = math.exp %139 : vector<8x128xf32>
    %cst_32 = arith.constant 1.000000e+00 : f32
    %141 = vector.broadcast %cst_32 : f32 to vector<8x128xf32>
    %142 = arith.addf %141, %140 : vector<8x128xf32>
    %143 = arith.divf %141, %142 : vector<8x128xf32>
    %144 = arith.mulf %135, %117 : vector<8x128xf32>
    %145 = arith.mulf %129, %137 : vector<8x128xf32>
    %146 = arith.addf %144, %145 : vector<8x128xf32>
    %147 = math.tanh %146 : vector<8x128xf32>
    %148 = arith.mulf %143, %147 : vector<8x128xf32>
    %149 = vector.extract_strided_slice %14 {offsets = [40, 0], sizes = [8, 512], strides = [1, 1]} : vector<64x512xf32> to vector<8x512xf32>
    %c0_33 = arith.constant 0 : index
    %c0_34 = arith.constant 0 : index
    %150 = vector.load %arg3[%c0_33, %c0_34] : memref<128x512xf32, #tpu.memory_space<vmem>>, vector<128x512xf32>
    %cst_35 = arith.constant dense<0.000000e+00> : vector<8x512xf32>
    %151 = tpu.matmul %148, %150, %cst_35 {dimension_numbers = #tpu.dot_dimension_numbers<[1], [0], [0], [1], [0, 0, 1, 1], [], []>} : vector<8x128xf32>, vector<128x512xf32>, vector<8x512xf32> -> vector<8x512xf32>
    %152 = arith.addf %149, %151 : vector<8x512xf32>
    %153 = vector.extract_strided_slice %152 {offsets = [0, 0], sizes = [8, 128], strides = [1, 1]} : vector<8x512xf32> to vector<8x128xf32>
    %154 = arith.negf %153 : vector<8x128xf32>
    %155 = math.exp %154 : vector<8x128xf32>
    %cst_36 = arith.constant 1.000000e+00 : f32
    %156 = vector.broadcast %cst_36 : f32 to vector<8x128xf32>
    %157 = arith.addf %156, %155 : vector<8x128xf32>
    %158 = arith.divf %156, %157 : vector<8x128xf32>
    %159 = vector.extract_strided_slice %152 {offsets = [0, 128], sizes = [8, 128], strides = [1, 1]} : vector<8x512xf32> to vector<8x128xf32>
    %160 = arith.negf %159 : vector<8x128xf32>
    %161 = math.exp %160 : vector<8x128xf32>
    %cst_37 = arith.constant 1.000000e+00 : f32
    %162 = vector.broadcast %cst_37 : f32 to vector<8x128xf32>
    %163 = arith.addf %162, %161 : vector<8x128xf32>
    %164 = arith.divf %162, %163 : vector<8x128xf32>
    %165 = vector.extract_strided_slice %152 {offsets = [0, 256], sizes = [8, 128], strides = [1, 1]} : vector<8x512xf32> to vector<8x128xf32>
    %166 = math.tanh %165 : vector<8x128xf32>
    %167 = vector.extract_strided_slice %152 {offsets = [0, 384], sizes = [8, 128], strides = [1, 1]} : vector<8x512xf32> to vector<8x128xf32>
    %168 = arith.negf %167 : vector<8x128xf32>
    %169 = math.exp %168 : vector<8x128xf32>
    %cst_38 = arith.constant 1.000000e+00 : f32
    %170 = vector.broadcast %cst_38 : f32 to vector<8x128xf32>
    %171 = arith.addf %170, %169 : vector<8x128xf32>
    %172 = arith.divf %170, %171 : vector<8x128xf32>
    %173 = arith.mulf %164, %146 : vector<8x128xf32>
    %174 = arith.mulf %158, %166 : vector<8x128xf32>
    %175 = arith.addf %173, %174 : vector<8x128xf32>
    %176 = math.tanh %175 : vector<8x128xf32>
    %177 = arith.mulf %172, %176 : vector<8x128xf32>
    %178 = vector.extract_strided_slice %14 {offsets = [48, 0], sizes = [8, 512], strides = [1, 1]} : vector<64x512xf32> to vector<8x512xf32>
    %c0_39 = arith.constant 0 : index
    %c0_40 = arith.constant 0 : index
    %179 = vector.load %arg3[%c0_39, %c0_40] : memref<128x512xf32, #tpu.memory_space<vmem>>, vector<128x512xf32>
    %cst_41 = arith.constant dense<0.000000e+00> : vector<8x512xf32>
    %180 = tpu.matmul %177, %179, %cst_41 {dimension_numbers = #tpu.dot_dimension_numbers<[1], [0], [0], [1], [0, 0, 1, 1], [], []>} : vector<8x128xf32>, vector<128x512xf32>, vector<8x512xf32> -> vector<8x512xf32>
    %181 = arith.addf %178, %180 : vector<8x512xf32>
    %182 = vector.extract_strided_slice %181 {offsets = [0, 0], sizes = [8, 128], strides = [1, 1]} : vector<8x512xf32> to vector<8x128xf32>
    %183 = arith.negf %182 : vector<8x128xf32>
    %184 = math.exp %183 : vector<8x128xf32>
    %cst_42 = arith.constant 1.000000e+00 : f32
    %185 = vector.broadcast %cst_42 : f32 to vector<8x128xf32>
    %186 = arith.addf %185, %184 : vector<8x128xf32>
    %187 = arith.divf %185, %186 : vector<8x128xf32>
    %188 = vector.extract_strided_slice %181 {offsets = [0, 128], sizes = [8, 128], strides = [1, 1]} : vector<8x512xf32> to vector<8x128xf32>
    %189 = arith.negf %188 : vector<8x128xf32>
    %190 = math.exp %189 : vector<8x128xf32>
    %cst_43 = arith.constant 1.000000e+00 : f32
    %191 = vector.broadcast %cst_43 : f32 to vector<8x128xf32>
    %192 = arith.addf %191, %190 : vector<8x128xf32>
    %193 = arith.divf %191, %192 : vector<8x128xf32>
    %194 = vector.extract_strided_slice %181 {offsets = [0, 256], sizes = [8, 128], strides = [1, 1]} : vector<8x512xf32> to vector<8x128xf32>
    %195 = math.tanh %194 : vector<8x128xf32>
    %196 = vector.extract_strided_slice %181 {offsets = [0, 384], sizes = [8, 128], strides = [1, 1]} : vector<8x512xf32> to vector<8x128xf32>
    %197 = arith.negf %196 : vector<8x128xf32>
    %198 = math.exp %197 : vector<8x128xf32>
    %cst_44 = arith.constant 1.000000e+00 : f32
    %199 = vector.broadcast %cst_44 : f32 to vector<8x128xf32>
    %200 = arith.addf %199, %198 : vector<8x128xf32>
    %201 = arith.divf %199, %200 : vector<8x128xf32>
    %202 = arith.mulf %193, %175 : vector<8x128xf32>
    %203 = arith.mulf %187, %195 : vector<8x128xf32>
    %204 = arith.addf %202, %203 : vector<8x128xf32>
    %205 = math.tanh %204 : vector<8x128xf32>
    %206 = arith.mulf %201, %205 : vector<8x128xf32>
    %207 = vector.extract_strided_slice %14 {offsets = [56, 0], sizes = [8, 512], strides = [1, 1]} : vector<64x512xf32> to vector<8x512xf32>
    %c0_45 = arith.constant 0 : index
    %c0_46 = arith.constant 0 : index
    %208 = vector.load %arg3[%c0_45, %c0_46] : memref<128x512xf32, #tpu.memory_space<vmem>>, vector<128x512xf32>
    %cst_47 = arith.constant dense<0.000000e+00> : vector<8x512xf32>
    %209 = tpu.matmul %206, %208, %cst_47 {dimension_numbers = #tpu.dot_dimension_numbers<[1], [0], [0], [1], [0, 0, 1, 1], [], []>} : vector<8x128xf32>, vector<128x512xf32>, vector<8x512xf32> -> vector<8x512xf32>
    %210 = arith.addf %207, %209 : vector<8x512xf32>
    %211 = vector.extract_strided_slice %210 {offsets = [0, 0], sizes = [8, 128], strides = [1, 1]} : vector<8x512xf32> to vector<8x128xf32>
    %212 = arith.negf %211 : vector<8x128xf32>
    %213 = math.exp %212 : vector<8x128xf32>
    %cst_48 = arith.constant 1.000000e+00 : f32
    %214 = vector.broadcast %cst_48 : f32 to vector<8x128xf32>
    %215 = arith.addf %214, %213 : vector<8x128xf32>
    %216 = arith.divf %214, %215 : vector<8x128xf32>
    %217 = vector.extract_strided_slice %210 {offsets = [0, 128], sizes = [8, 128], strides = [1, 1]} : vector<8x512xf32> to vector<8x128xf32>
    %218 = arith.negf %217 : vector<8x128xf32>
    %219 = math.exp %218 : vector<8x128xf32>
    %cst_49 = arith.constant 1.000000e+00 : f32
    %220 = vector.broadcast %cst_49 : f32 to vector<8x128xf32>
    %221 = arith.addf %220, %219 : vector<8x128xf32>
    %222 = arith.divf %220, %221 : vector<8x128xf32>
    %223 = vector.extract_strided_slice %210 {offsets = [0, 256], sizes = [8, 128], strides = [1, 1]} : vector<8x512xf32> to vector<8x128xf32>
    %224 = math.tanh %223 : vector<8x128xf32>
    %225 = vector.extract_strided_slice %210 {offsets = [0, 384], sizes = [8, 128], strides = [1, 1]} : vector<8x512xf32> to vector<8x128xf32>
    %226 = arith.negf %225 : vector<8x128xf32>
    %227 = math.exp %226 : vector<8x128xf32>
    %cst_50 = arith.constant 1.000000e+00 : f32
    %228 = vector.broadcast %cst_50 : f32 to vector<8x128xf32>
    %229 = arith.addf %228, %227 : vector<8x128xf32>
    %230 = arith.divf %228, %229 : vector<8x128xf32>
    %231 = arith.mulf %222, %204 : vector<8x128xf32>
    %232 = arith.mulf %216, %224 : vector<8x128xf32>
    %233 = arith.addf %231, %232 : vector<8x128xf32>
    %234 = math.tanh %233 : vector<8x128xf32>
    %235 = arith.mulf %230, %234 : vector<8x128xf32>
    %c0_51 = arith.constant 0 : index
    %c0_52 = arith.constant 0 : index
    %236 = vector.load %arg5[%c0_51, %c0_52] : memref<8x128xf32, #tpu.memory_space<vmem>>, vector<8x128xf32>
    tpu.vector_store %arg5[%c0_51, %c0_52], %235 {strides = array<i32>} : memref<8x128xf32, #tpu.memory_space<vmem>>, vector<8x128xf32>,
    return
  }
  func.func @transform_0(%arg0: i32) -> (i32, i32) {
    %c0_i32 = arith.constant 0 : i32
    %c0_i32_0 = arith.constant 0 : i32
    %c0_i32_1 = arith.constant 0 : i32
    return %c0_i32, %c0_i32_0 : i32, i32
  }
  func.func @transform_1(%arg0: i32) -> (i32, i32) {
    %c0_i32 = arith.constant 0 : i32
    %c0_i32_0 = arith.constant 0 : i32
    %c0_i32_1 = arith.constant 0 : i32
    return %c0_i32, %c0_i32_0 : i32, i32
  }
  func.func @transform_2(%arg0: i32) -> (i32, i32) {
    %c0_i32 = arith.constant 0 : i32
    %c0_i32_0 = arith.constant 0 : i32
    %c0_i32_1 = arith.constant 0 : i32
    return %c0_i32, %c0_i32_0 : i32, i32
  }
  func.func @transform_3(%arg0: i32) -> (i32, i32) {
    %c0_i32 = arith.constant 0 : i32
    %c0_i32_0 = arith.constant 0 : i32
    %c0_i32_1 = arith.constant 0 : i32
    return %c0_i32, %c0_i32_0 : i32, i32
  }
  func.func @transform_4(%arg0: i32) -> (i32, i32) {
    %c0_i32 = arith.constant 0 : i32
    %c0_i32_0 = arith.constant 0 : i32
    %c0_i32_1 = arith.constant 0 : i32
    return %c0_i32, %c0_i32_0 : i32, i32
  }
}

</mosaic_0001>

<llo_original>
// kernel: lstm_encoder_forward.1
$region0: #{lstm_encoder_forward.1}
  #allocation0 [shape = 'u32[]', space=smem, size = 0x4, offset = 0x4, fixed_abs, tag = 'smem constant byte address 0x4 - core index']
  #allocation1 [shape = 'u32[144,128]{1,0:T(1,128)}', space=vmem, size = 0x12000, scoped, tag = 'internal scratch']
  %s0 = inlined_call_operand.vmem [shape: f32[64,2], index: 0, kind: input, shape index: {}]
  %s1 = inlined_call_operand.vmem [shape: f32[2,512], index: 1, kind: input, shape index: {}]
  %s2 = inlined_call_operand.hbm [shape: f32[128,512], index: 2, kind: input, shape index: {}]
  %s3 = inlined_call_operand.vmem [shape: f32[1,512], index: 3, kind: input, shape index: {}]
  %s4 = inlined_call_operand.vmem [shape: f32[8,128], index: 4, kind: output, shape index: {}]
  %s5 = sld [smem:[#allocation0]]
  $region30: #{lstm_encoder_forward.1} parent=0
    _
  %s7 = ssub.s32 1, %s5
  %s8 = scalar_select 0, %s7, %s5
  $region1: #{lstm_encoder_forward.1} parent=0
    #allocation2 [shape = 'u8[262144]{0}', space=vmem, size = 0x40000, scoped, tag = 'input window, operand 2, single buffered']
    #allocation3 [shape = 's32[1]{0}', space=sflag, size = 0x4, scoped, tag = 'scoped memory for lstm_encoder_forward.1']
    %9 = vsyncpa [#allocation3], 0
    // Predicated region
    $region2: #{lstm_encoder_forward.1} parent=1 // pred_check
      _
    $region3: #{lstm_encoder_forward.1} parent=1 // pred_check_branch
      %11 = sbr.rel (0) target = $region5
    $region4: #{lstm_encoder_forward.1} parent=1 // pred_region
      _
    $region5: #{lstm_encoder_forward.1} parent=1 // pred_fallthru
      _
    // Predicated region
    $region6: #{lstm_encoder_forward.1} parent=1 // pred_check
      _
    $region7: #{lstm_encoder_forward.1} parent=1 // pred_check_branch
      %13 = sbr.rel (0) target = $region9
    $region8: #{lstm_encoder_forward.1} parent=1 // pred_region
      _
    $region9: #{lstm_encoder_forward.1} parent=1 // pred_fallthru
      _
    // Predicated region
    $region10: #{lstm_encoder_forward.1} parent=1 // pred_check
      _
    $region11: #{lstm_encoder_forward.1} parent=1 // pred_check_branch
      %15 = sbr.rel (0) target = $region13
    $region12: #{lstm_encoder_forward.1} parent=1 // pred_region
      %s17 = ssub.s32 8192, 8192
      %18 = vsyncadd [#allocation3], %s17
      %s19 = sshll.u32 [#allocation2], 4
      %s20 = int_to_ptr.vmem [resolvable:$true] %s19
      %25 = dma.hbm_to_vmem [thread:$0]  %s2, 8192, %s20, [#allocation3], 512, 512, 32
    $region13: #{lstm_encoder_forward.1} parent=1 // pred_fallthru
      _
    // Predicated region
    $region14: #{lstm_encoder_forward.1} parent=1 // pred_check
      _
    $region15: #{lstm_encoder_forward.1} parent=1 // pred_check_branch
      %27 = sbr.rel (0) target = $region17
    $region16: #{lstm_encoder_forward.1} parent=1 // pred_region
      _
    $region17: #{lstm_encoder_forward.1} parent=1 // pred_fallthru
      _
    // Predicated region
    $region18: #{lstm_encoder_forward.1} parent=1 // pred_check
      _
    $region19: #{lstm_encoder_forward.1} parent=1 // pred_check_branch
      %29 = sbr.rel (0) target = $region21
    $region20: #{lstm_encoder_forward.1} parent=1 // pred_region
      %30 = dma.done [#allocation3], 8192
    $region21: #{lstm_encoder_forward.1} parent=1 // pred_fallthru
      _
    %v31 = vld [vmem:[%s3] sm:$0xf]
    %v33 = vlaneseq
    %v34 = vshrl.u32 %v33, 7
    %v35 = vsub.s32 0, %v34
    %v36 = vrot.slane %v31, %v35
    %v37 = vlaneseq
    %v38 = vshrl.u32 %v37, 7
    %v39 = vsub.s32 1, %v38
    %v40 = vrot.slane %v31, %v39
    %v41 = vlaneseq
    %v42 = vshrl.u32 %v41, 7
    %v43 = vsub.s32 2, %v42
    %v44 = vrot.slane %v31, %v43
    %v45 = vlaneseq
    %v46 = vshrl.u32 %v45, 7
    %v47 = vsub.s32 3, %v46
    %v48 = vrot.slane %v31, %v47
    %v53 = vld [vmem:[%s0] sm:$0xff]
    %v54 = vld [vmem:[%s0 + $0x8] sm:$0xff]
    %v55 = vld [vmem:[%s0 + $0x10] sm:$0xff]
    %v56 = vld [vmem:[%s0 + $0x18] sm:$0xff]
    %v57 = vld [vmem:[%s0 + $0x20] sm:$0xff]
    %v58 = vld [vmem:[%s0 + $0x28] sm:$0xff]
    %v59 = vld [vmem:[%s0 + $0x30] sm:$0xff]
    %v60 = vld [vmem:[%s0 + $0x38] sm:$0xff]
    %v61 = vld [vmem:[%s1] ss:$2 sm:$0xf]
    %63 = vset.pattern.permute.xlu0 0
    %64 = vperm.xlu0 %63, %v53
    %v65 = vpop.permute.xlu0 %64
    %68 = vset.pattern.permute.xlu0 0
    %69 = vperm.xlu0 %68, %v54
    %v70 = vpop.permute.xlu0 %69
    %73 = vset.pattern.permute.xlu0 0
    %74 = vperm.xlu0 %73, %v55
    %v75 = vpop.permute.xlu0 %74
    %78 = vset.pattern.permute.xlu0 0
    %79 = vperm.xlu0 %78, %v56
    %v80 = vpop.permute.xlu0 %79
    %83 = vset.pattern.permute.xlu0 0
    %84 = vperm.xlu0 %83, %v57
    %v85 = vpop.permute.xlu0 %84
    %88 = vset.pattern.permute.xlu0 0
    %89 = vperm.xlu0 %88, %v58
    %v90 = vpop.permute.xlu0 %89
    %93 = vset.pattern.permute.xlu0 0
    %94 = vperm.xlu0 %93, %v59
    %v95 = vpop.permute.xlu0 %94
    %98 = vset.pattern.permute.xlu0 0
    %99 = vperm.xlu0 %98, %v60
    %v100 = vpop.permute.xlu0 %99
    %v103 = vlaneseq
    %v104 = vshrl.u32 %v103, 7
    %v105 = vsub.s32 0, %v104
    %v106 = vrot.slane %v61, %v105
    %v107 = vlaneseq
    %v108 = vshrl.u32 %v107, 7
    %v109 = vsub.s32 1, %v108
    %v110 = vrot.slane %v61, %v109
    %v111 = vlaneseq
    %v112 = vshrl.u32 %v111, 7
    %v113 = vsub.s32 2, %v112
    %v114 = vrot.slane %v61, %v113
    %v115 = vlaneseq
    %v116 = vshrl.u32 %v115, 7
    %v117 = vsub.s32 3, %v116
    %v118 = vrot.slane %v61, %v117
    %v123 = vmul.f32 %v65, %v106
    %v124 = vmul.f32 %v65, %v114
    %v125 = vmul.f32 %v65, %v118
    %v126 = vmul.f32 %v70, %v106
    %v127 = vmul.f32 %v70, %v110
    %v128 = vmul.f32 %v70, %v114
    %v129 = vmul.f32 %v70, %v118
    %v130 = vmul.f32 %v75, %v106
    %v131 = vmul.f32 %v75, %v110
    %v132 = vmul.f32 %v75, %v114
    %v133 = vmul.f32 %v75, %v118
    %v134 = vmul.f32 %v80, %v106
    %v135 = vmul.f32 %v80, %v110
    %v136 = vmul.f32 %v80, %v114
    %v137 = vmul.f32 %v80, %v118
    %v138 = vmul.f32 %v85, %v106
    %v139 = vmul.f32 %v85, %v110
    %v140 = vmul.f32 %v85, %v114
    %v141 = vmul.f32 %v85, %v118
    %v142 = vmul.f32 %v90, %v106
    %v143 = vmul.f32 %v90, %v110
    %v144 = vmul.f32 %v90, %v114
    %v145 = vmul.f32 %v90, %v118
    %v146 = vmul.f32 %v95, %v106
    %v147 = vmul.f32 %v95, %v110
    %v148 = vmul.f32 %v95, %v114
    %v149 = vmul.f32 %v95, %v118
    %v150 = vmul.f32 %v100, %v106
    %v151 = vmul.f32 %v100, %v110
    %v152 = vmul.f32 %v100, %v114
    %v153 = vmul.f32 %v100, %v118
    %v154 = vadd.f32 %v36, %v123
    %v155 = vadd.f32 %v44, %v124
    %v156 = vadd.f32 %v48, %v125
    %v157 = vadd.f32 %v36, %v126
    %v158 = vadd.f32 %v40, %v127
    %v159 = vadd.f32 %v44, %v128
    %v160 = vadd.f32 %v48, %v129
    %v161 = vadd.f32 %v36, %v130
    %v162 = vadd.f32 %v40, %v131
    %v163 = vadd.f32 %v44, %v132
    %v164 = vadd.f32 %v48, %v133
    %v165 = vadd.f32 %v36, %v134
    %v166 = vadd.f32 %v40, %v135
    %v167 = vadd.f32 %v44, %v136
    %v168 = vadd.f32 %v48, %v137
    %v169 = vadd.f32 %v36, %v138
    %v170 = vadd.f32 %v40, %v139
    %v171 = vadd.f32 %v44, %v140
    %v172 = vadd.f32 %v48, %v141
    %v173 = vadd.f32 %v36, %v142
    %v174 = vadd.f32 %v40, %v143
    %v175 = vadd.f32 %v44, %v144
    %v176 = vadd.f32 %v48, %v145
    %v177 = vadd.f32 %v36, %v146
    %v178 = vadd.f32 %v40, %v147
    %v179 = vadd.f32 %v44, %v148
    %v180 = vadd.f32 %v48, %v149
    %v181 = vadd.f32 %v36, %v150
    %v182 = vadd.f32 %v40, %v151
    %v183 = vadd.f32 %v44, %v152
    %v184 = vadd.f32 %v48, %v153
    %s185 = scalar_lea.vmem %s1, 1
    %v186 = vld [vmem:[%s185] ss:$2 sm:$0xf]
    %187 = vset.pattern.permute.xlu0 1
    %188 = vperm.xlu0 %187, %v53
    %v189 = vpop.permute.xlu0 %188
    %191 = vset.pattern.permute.xlu0 1
    %192 = vperm.xlu0 %191, %v54
    %v193 = vpop.permute.xlu0 %192
    %195 = vset.pattern.permute.xlu0 1
    %196 = vperm.xlu0 %195, %v55
    %v197 = vpop.permute.xlu0 %196
    %199 = vset.pattern.permute.xlu0 1
    %200 = vperm.xlu0 %199, %v56
    %v201 = vpop.permute.xlu0 %200
    %203 = vset.pattern.permute.xlu0 1
    %204 = vperm.xlu0 %203, %v57
    %v205 = vpop.permute.xlu0 %204
    %207 = vset.pattern.permute.xlu0 1
    %208 = vperm.xlu0 %207, %v58
    %v209 = vpop.permute.xlu0 %208
    %211 = vset.pattern.permute.xlu0 1
    %212 = vperm.xlu0 %211, %v59
    %v213 = vpop.permute.xlu0 %212
    %215 = vset.pattern.permute.xlu0 1
    %216 = vperm.xlu0 %215, %v60
    %v217 = vpop.permute.xlu0 %216
    %v220 = vlaneseq
    %v221 = vshrl.u32 %v220, 7
    %v222 = vsub.s32 0, %v221
    %v223 = vrot.slane %v186, %v222
    %v224 = vlaneseq
    %v225 = vshrl.u32 %v224, 7
    %v226 = vsub.s32 1, %v225
    %v227 = vrot.slane %v186, %v226
    %v228 = vlaneseq
    %v229 = vshrl.u32 %v228, 7
    %v230 = vsub.s32 2, %v229
    %v231 = vrot.slane %v186, %v230
    %v232 = vlaneseq
    %v233 = vshrl.u32 %v232, 7
    %v234 = vsub.s32 3, %v233
    %v235 = vrot.slane %v186, %v234
    %v240 = vmul.f32 %v189, %v223
    %v241 = vmul.f32 %v189, %v231
    %v242 = vmul.f32 %v189, %v235
    %v243 = vmul.f32 %v193, %v223
    %v244 = vmul.f32 %v193, %v227
    %v245 = vmul.f32 %v193, %v231
    %v246 = vmul.f32 %v193, %v235
    %v247 = vmul.f32 %v197, %v223
    %v248 = vmul.f32 %v197, %v227
    %v249 = vmul.f32 %v197, %v231
    %v250 = vmul.f32 %v197, %v235
    %v251 = vmul.f32 %v201, %v223
    %v252 = vmul.f32 %v201, %v227
    %v253 = vmul.f32 %v201, %v231
    %v254 = vmul.f32 %v201, %v235
    %v255 = vmul.f32 %v205, %v223
    %v256 = vmul.f32 %v205, %v227
    %v257 = vmul.f32 %v205, %v231
    %v258 = vmul.f32 %v205, %v235
    %v259 = vmul.f32 %v209, %v223
    %v260 = vmul.f32 %v209, %v227
    %v261 = vmul.f32 %v209, %v231
    %v262 = vmul.f32 %v209, %v235
    %v263 = vmul.f32 %v213, %v223
    %v264 = vmul.f32 %v213, %v227
    %v265 = vmul.f32 %v213, %v231
    %v266 = vmul.f32 %v213, %v235
    %v267 = vmul.f32 %v217, %v223
    %v268 = vmul.f32 %v217, %v227
    %v269 = vmul.f32 %v217, %v231
    %v270 = vmul.f32 %v217, %v235
    %v271 = vadd.f32 %v154, %v240
    %v272 = vadd.f32 %v155, %v241
    %v273 = vadd.f32 %v156, %v242
    %v274 = vadd.f32 %v157, %v243
    %v275 = vadd.f32 %v158, %v244
    %v276 = vadd.f32 %v159, %v245
    %v277 = vadd.f32 %v160, %v246
    %v278 = vadd.f32 %v161, %v247
    %v279 = vadd.f32 %v162, %v248
    %v280 = vadd.f32 %v163, %v249
    %v281 = vadd.f32 %v164, %v250
    %v282 = vadd.f32 %v165, %v251
    %v283 = vadd.f32 %v166, %v252
    %v284 = vadd.f32 %v167, %v253
    %v285 = vadd.f32 %v168, %v254
    %v286 = vadd.f32 %v169, %v255
    %v287 = vadd.f32 %v170, %v256
    %v288 = vadd.f32 %v171, %v257
    %v289 = vadd.f32 %v172, %v258
    %v290 = vadd.f32 %v173, %v259
    %v291 = vadd.f32 %v174, %v260
    %v292 = vadd.f32 %v175, %v261
    %v293 = vadd.f32 %v176, %v262
    %v294 = vadd.f32 %v177, %v263
    %v295 = vadd.f32 %v178, %v264
    %v296 = vadd.f32 %v179, %v265
    %v297 = vadd.f32 %v180, %v266
    %v298 = vadd.f32 %v181, %v267
    %v299 = vadd.f32 %v182, %v268
    %v300 = vadd.f32 %v183, %v269
    %v301 = vadd.f32 %v184, %v270
    %v302 = vxor.u32 %v271, 2147483648
    %v303 = vmul.f32 %v302, 1.442695
    %v304 = vpow.pop %v303
    %v305 = vadd.f32 %v304, 1.0
    %v306 = vrcp.pop %v305
    %v307 = vmul.f32 1.0, %v306
    %v308 = vtanh.pop %v272
    %v309 = vxor.u32 %v273, 2147483648
    %v310 = vmul.f32 %v309, 1.442695
    %v311 = vpow.pop %v310
    %v312 = vadd.f32 %v311, 1.0
    %v313 = vrcp.pop %v312
    %v314 = vmul.f32 1.0, %v313
    %v315 = vmul.f32 %v307, %v308
    %v316 = vtanh.pop %v315
    %v317 = vmul.f32 %v314, %v316
    %v318 = vld [vmem:[#allocation2] sm:$0xff]
    %v319 = vld [vmem:[#allocation2 + $0x8] sm:$0xff]
    %v320 = vld [vmem:[#allocation2 + $0x10] sm:$0xff]
    %v321 = vld [vmem:[#allocation2 + $0x18] sm:$0xff]
    %v322 = vld [vmem:[#allocation2 + $0x20] sm:$0xff]
    %v323 = vld [vmem:[#allocation2 + $0x28] sm:$0xff]
    %v324 = vld [vmem:[#allocation2 + $0x30] sm:$0xff]
    %v325 = vld [vmem:[#allocation2 + $0x38] sm:$0xff]
    %v326 = vld [vmem:[#allocation2 + $0x40] sm:$0xff]
    %v327 = vld [vmem:[#allocation2 + $0x48] sm:$0xff]
    %v328 = vld [vmem:[#allocation2 + $0x50] sm:$0xff]
    %v329 = vld [vmem:[#allocation2 + $0x58] sm:$0xff]
    %v330 = vld [vmem:[#allocation2 + $0x60] sm:$0xff]
    %v331 = vld [vmem:[#allocation2 + $0x68] sm:$0xff]
    %v332 = vld [vmem:[#allocation2 + $0x70] sm:$0xff]
    %v333 = vld [vmem:[#allocation2 + $0x78] sm:$0xff]
    %v334 = vld [vmem:[#allocation2 + $0x80] sm:$0xff]
    %v335 = vld [vmem:[#allocation2 + $0x88] sm:$0xff]
    %v336 = vld [vmem:[#allocation2 + $0x90] sm:$0xff]
    %v337 = vld [vmem:[#allocation2 + $0x98] sm:$0xff]
    %v338 = vld [vmem:[#allocation2 + $0xa0] sm:$0xff]
    %v339 = vld [vmem:[#allocation2 + $0xa8] sm:$0xff]
    %v340 = vld [vmem:[#allocation2 + $0xb0] sm:$0xff]
    %v341 = vld [vmem:[#allocation2 + $0xb8] sm:$0xff]
    %v342 = vld [vmem:[#allocation2 + $0xc0] sm:$0xff]
    %v343 = vld [vmem:[#allocation2 + $0xc8] sm:$0xff]
    %v344 = vld [vmem:[#allocation2 + $0xd0] sm:$0xff]
    %v345 = vld [vmem:[#allocation2 + $0xd8] sm:$0xff]
    %v346 = vld [vmem:[#allocation2 + $0xe0] sm:$0xff]
    %v347 = vld [vmem:[#allocation2 + $0xe8] sm:$0xff]
    %v348 = vld [vmem:[#allocation2 + $0xf0] sm:$0xff]
    %v349 = vld [vmem:[#allocation2 + $0xf8] sm:$0xff]
    %v350 = vld [vmem:[#allocation2 + $0x100] sm:$0xff]
    %v351 = vld [vmem:[#allocation2 + $0x108] sm:$0xff]
    %v352 = vld [vmem:[#allocation2 + $0x110] sm:$0xff]
    %v353 = vld [vmem:[#allocation2 + $0x118] sm:$0xff]
    %v354 = vld [vmem:[#allocation2 + $0x120] sm:$0xff]
    %v355 = vld [vmem:[#allocation2 + $0x128] sm:$0xff]
    %v356 = vld [vmem:[#allocation2 + $0x130] sm:$0xff]
    %v357 = vld [vmem:[#allocation2 + $0x138] sm:$0xff]
    %v358 = vld [vmem:[#allocation2 + $0x140] sm:$0xff]
    %v359 = vld [vmem:[#allocation2 + $0x148] sm:$0xff]
    %v360 = vld [vmem:[#allocation2 + $0x150] sm:$0xff]
    %v361 = vld [vmem:[#allocation2 + $0x158] sm:$0xff]
    %v362 = vld [vmem:[#allocation2 + $0x160] sm:$0xff]
    %v363 = vld [vmem:[#allocation2 + $0x168] sm:$0xff]
    %v364 = vld [vmem:[#allocation2 + $0x170] sm:$0xff]
    %v365 = vld [vmem:[#allocation2 + $0x178] sm:$0xff]
    %v366 = vld [vmem:[#allocation2 + $0x180] sm:$0xff]
    %v367 = vld [vmem:[#allocation2 + $0x188] sm:$0xff]
    %v368 = vld [vmem:[#allocation2 + $0x190] sm:$0xff]
    %v369 = vld [vmem:[#allocation2 + $0x198] sm:$0xff]
    %v370 = vld [vmem:[#allocation2 + $0x1a0] sm:$0xff]
    %v371 = vld [vmem:[#allocation2 + $0x1a8] sm:$0xff]
    %v372 = vld [vmem:[#allocation2 + $0x1b0] sm:$0xff]
    %v373 = vld [vmem:[#allocation2 + $0x1b8] sm:$0xff]
    %v374 = vld [vmem:[#allocation2 + $0x1c0] sm:$0xff]
    %v375 = vld [vmem:[#allocation2 + $0x1c8] sm:$0xff]
    %v376 = vld [vmem:[#allocation2 + $0x1d0] sm:$0xff]
    %v377 = vld [vmem:[#allocation2 + $0x1d8] sm:$0xff]
    %v378 = vld [vmem:[#allocation2 + $0x1e0] sm:$0xff]
    %v379 = vld [vmem:[#allocation2 + $0x1e8] sm:$0xff]
    %v380 = vld [vmem:[#allocation2 + $0x1f0] sm:$0xff]
    %v381 = vld [vmem:[#allocation2 + $0x1f8] sm:$0xff]
    %382 = vmatprep.subr.mxu0 %v379
    %383 = vmatpush1.msra.mxu0 %v378
    %384 = vmatprep.subr.mxu0 %v375
    %385 = vmatpush1.msra.mxu0 %v374
    %386 = vmatprep.subr.mxu0 %v371
    %387 = vmatpush1.msra.mxu0 %v370
    %388 = vmatprep.subr.mxu0 %v367
    %389 = vmatpush1.msra.mxu0 %v366
    %390 = vmatprep.subr.mxu0 %v363
    %391 = vmatpush1.msra.mxu0 %v362
    %392 = vmatprep.subr.mxu0 %v359
    %393 = vmatpush1.msra.mxu0 %v358
    %394 = vmatprep.subr.mxu0 %v355
    %395 = vmatpush1.msra.mxu0 %v354
    %396 = vmatprep.subr.mxu0 %v351
    %397 = vmatpush1.msra.mxu0 %v350
    %398 = vmatprep.subr.mxu0 %v347
    %399 = vmatpush1.msra.mxu0 %v346
    %400 = vmatprep.subr.mxu0 %v343
    %401 = vmatpush1.msra.mxu0 %v342
    %402 = vmatprep.subr.mxu0 %v339
    %403 = vmatpush1.msra.mxu0 %v338
    %404 = vmatprep.subr.mxu0 %v335
    %405 = vmatpush1.msra.mxu0 %v334
    %406 = vmatprep.subr.mxu0 %v331
    %407 = vmatpush1.msra.mxu0 %v330
    %408 = vmatprep.subr.mxu0 %v327
    %409 = vmatpush1.msra.mxu0 %v326
    %410 = vmatprep.subr.mxu0 %v323
    %411 = vmatpush1.msra.mxu0 %v322
    %412 = vmatprep.subr.mxu0 %v319
    %413 = vmatpush1.msra.mxu0 %v318
    %414 = vmatprep.subr.mxu0 0.0
    %415 = vmatpush2.msra.mxu0 0.0
    %416 = vmatprep.subr.mxu0 0.0
    %417 = vmatpush2.msra.mxu0 0.0
    %418 = vmatprep.subr.mxu0 0.0
    %419 = vmatpush2.msra.mxu0 0.0
    %420 = vmatprep.subr.mxu0 0.0
    %421 = vmatpush2.msra.mxu0 0.0
    %422 = vmatprep.subr.mxu0 0.0
    %423 = vmatpush2.msra.mxu0 0.0
    %424 = vmatprep.subr.mxu0 0.0
    %425 = vmatpush2.msra.mxu0 0.0
    %426 = vmatprep.subr.mxu0 0.0
    %427 = vmatpush2.msra.mxu0 0.0
    %428 = vmatprep.subr.mxu0 0.0
    %429 = vmatpush2.msra.mxu0 0.0
    %430 = vmatprep.subr.mxu0 0.0
    %431 = vmatpush2.msra.mxu0 0.0
    %432 = vmatprep.subr.mxu0 0.0
    %433 = vmatpush2.msra.mxu0 0.0
    %434 = vmatprep.subr.mxu0 0.0
    %435 = vmatpush2.msra.mxu0 0.0
    %436 = vmatprep.subr.mxu0 0.0
    %437 = vmatpush2.msra.mxu0 0.0
    %438 = vmatprep.subr.mxu0 0.0
    %439 = vmatpush2.msra.mxu0 0.0
    %440 = vmatprep.subr.mxu0 0.0
    %441 = vmatpush2.msra.mxu0 0.0
    %442 = vmatprep.subr.mxu0 0.0
    %443 = vmatpush2.msra.mxu0 0.0
    %444 = vmatprep.subr.mxu0 0.0
    %445 = vmatpush2.msra.mxu0 0.0
    %446 = vmatprep.mubr.f32.mxu0 0.0
    %447 = vmatmul.mubr.f32.gmra.mxu0 %v317
    %v448 = vpop.f32.mrf.mxu0
    %v449 = vadd.f32 0.0, %v448
    %v450 = vpop.f32.mrf.mxu0
    %v451 = vadd.f32 0.0, %v450
    %452 = vdwg.mxu0
    %453 = vmatprep.subr.mxu0 %v381
    %454 = vmatpush1.msra.mxu0 %v380
    %455 = vmatprep.subr.mxu0 %v377
    %456 = vmatpush1.msra.mxu0 %v376
    %457 = vmatprep.subr.mxu0 %v373
    %458 = vmatpush1.msra.mxu0 %v372
    %459 = vmatprep.subr.mxu0 %v369
    %460 = vmatpush1.msra.mxu0 %v368
    %461 = vmatprep.subr.mxu0 %v365
    %462 = vmatpush1.msra.mxu0 %v364
    %463 = vmatprep.subr.mxu0 %v361
    %464 = vmatpush1.msra.mxu0 %v360
    %465 = vmatprep.subr.mxu0 %v357
    %466 = vmatpush1.msra.mxu0 %v356
    %467 = vmatprep.subr.mxu0 %v353
    %468 = vmatpush1.msra.mxu0 %v352
    %469 = vmatprep.subr.mxu0 %v349
    %470 = vmatpush1.msra.mxu0 %v348
    %471 = vmatprep.subr.mxu0 %v345
    %472 = vmatpush1.msra.mxu0 %v344
    %473 = vmatprep.subr.mxu0 %v341
    %474 = vmatpush1.msra.mxu0 %v340
    %475 = vmatprep.subr.mxu0 %v337
    %476 = vmatpush1.msra.mxu0 %v336
    %477 = vmatprep.subr.mxu0 %v333
    %478 = vmatpush1.msra.mxu0 %v332
    %479 = vmatprep.subr.mxu0 %v329
    %480 = vmatpush1.msra.mxu0 %v328
    %481 = vmatprep.subr.mxu0 %v325
    %482 = vmatpush1.msra.mxu0 %v324
    %483 = vmatprep.subr.mxu0 %v321
    %484 = vmatpush1.msra.mxu0 %v320
    %485 = vmatprep.subr.mxu0 0.0
    %486 = vmatpush2.msra.mxu0 0.0
    %487 = vmatprep.subr.mxu0 0.0
    %488 = vmatpush2.msra.mxu0 0.0
    %489 = vmatprep.subr.mxu0 0.0
    %490 = vmatpush2.msra.mxu0 0.0
    %491 = vmatprep.subr.mxu0 0.0
    %492 = vmatpush2.msra.mxu0 0.0
    %493 = vmatprep.subr.mxu0 0.0
    %494 = vmatpush2.msra.mxu0 0.0
    %495 = vmatprep.subr.mxu0 0.0
    %496 = vmatpush2.msra.mxu0 0.0
    %497 = vmatprep.subr.mxu0 0.0
    %498 = vmatpush2.msra.mxu0 0.0
    %499 = vmatprep.subr.mxu0 0.0
    %500 = vmatpush2.msra.mxu0 0.0
    %501 = vmatprep.subr.mxu0 0.0
    %502 = vmatpush2.msra.mxu0 0.0
    %503 = vmatprep.subr.mxu0 0.0
    %504 = vmatpush2.msra.mxu0 0.0
    %505 = vmatprep.subr.mxu0 0.0
    %506 = vmatpush2.msra.mxu0 0.0
    %507 = vmatprep.subr.mxu0 0.0
    %508 = vmatpush2.msra.mxu0 0.0
    %509 = vmatprep.subr.mxu0 0.0
    %510 = vmatpush2.msra.mxu0 0.0
    %511 = vmatprep.subr.mxu0 0.0
    %512 = vmatpush2.msra.mxu0 0.0
    %513 = vmatprep.subr.mxu0 0.0
    %514 = vmatpush2.msra.mxu0 0.0
    %515 = vmatprep.subr.mxu0 0.0
    %516 = vmatpush2.msra.mxu0 0.0
    %517 = vmatprep.mubr.f32.mxu0 0.0
    %518 = vmatmul.mubr.f32.gmra.mxu0 %v317
    %v519 = vpop.f32.mrf.mxu0
    %v520 = vadd.f32 0.0, %v519
    %v521 = vpop.f32.mrf.mxu0
    %v522 = vadd.f32 0.0, %v521
    %523 = vdwg.mxu0
    %v524 = vadd.f32 %v274, %v449
    %v525 = vadd.f32 %v275, %v451
    %v526 = vadd.f32 %v276, %v520
    %v527 = vadd.f32 %v277, %v522
    %v528 = vxor.u32 %v524, 2147483648
    %v529 = vmul.f32 %v528, 1.442695
    %v530 = vpow.pop %v529
    %v531 = vadd.f32 %v530, 1.0
    %v532 = vrcp.pop %v531
    %v533 = vmul.f32 1.0, %v532
    %v534 = vxor.u32 %v525, 2147483648
    %v535 = vmul.f32 %v534, 1.442695
    %v536 = vpow.pop %v535
    %v537 = vadd.f32 %v536, 1.0
    %v538 = vrcp.pop %v537
    %v539 = vmul.f32 1.0, %v538
    %v540 = vtanh.pop %v526
    %v541 = vxor.u32 %v527, 2147483648
    %v542 = vmul.f32 %v541, 1.442695
    %v543 = vpow.pop %v542
    %v544 = vadd.f32 %v543, 1.0
    %v545 = vrcp.pop %v544
    %v546 = vmul.f32 1.0, %v545
    %v547 = vmul.f32 %v539, %v315
    %v548 = vmul.f32 %v533, %v540
    %v549 = vadd.f32 %v547, %v548
    %v550 = vtanh.pop %v549
    %v551 = vmul.f32 %v546, %v550
    %552 = vmatprep.subr.mxu0 %v379
    %553 = vmatpush1.msra.mxu0 %v378
    %554 = vmatprep.subr.mxu0 %v375
    %555 = vmatpush1.msra.mxu0 %v374
    %556 = vmatprep.subr.mxu0 %v371
    %557 = vmatpush1.msra.mxu0 %v370
    %558 = vmatprep.subr.mxu0 %v367
    %559 = vmatpush1.msra.mxu0 %v366
    %560 = vmatprep.subr.mxu0 %v363
    %561 = vmatpush1.msra.mxu0 %v362
    %562 = vmatprep.subr.mxu0 %v359
    %563 = vmatpush1.msra.mxu0 %v358
    %564 = vmatprep.subr.mxu0 %v355
    %565 = vmatpush1.msra.mxu0 %v354
    %566 = vmatprep.subr.mxu0 %v351
    %567 = vmatpush1.msra.mxu0 %v350
    %568 = vmatprep.subr.mxu0 %v347
    %569 = vmatpush1.msra.mxu0 %v346
    %570 = vmatprep.subr.mxu0 %v343
    %571 = vmatpush1.msra.mxu0 %v342
    %572 = vmatprep.subr.mxu0 %v339
    %573 = vmatpush1.msra.mxu0 %v338
    %574 = vmatprep.subr.mxu0 %v335
    %575 = vmatpush1.msra.mxu0 %v334
    %576 = vmatprep.subr.mxu0 %v331
    %577 = vmatpush1.msra.mxu0 %v330
    %578 = vmatprep.subr.mxu0 %v327
    %579 = vmatpush1.msra.mxu0 %v326
    %580 = vmatprep.subr.mxu0 %v323
    %581 = vmatpush1.msra.mxu0 %v322
    %582 = vmatprep.subr.mxu0 %v319
    %583 = vmatpush1.msra.mxu0 %v318
    %584 = vmatprep.subr.mxu0 0.0
    %585 = vmatpush2.msra.mxu0 0.0
    %586 = vmatprep.subr.mxu0 0.0
    %587 = vmatpush2.msra.mxu0 0.0
    %588 = vmatprep.subr.mxu0 0.0
    %589 = vmatpush2.msra.mxu0 0.0
    %590 = vmatprep.subr.mxu0 0.0
    %591 = vmatpush2.msra.mxu0 0.0
    %592 = vmatprep.subr.mxu0 0.0
    %593 = vmatpush2.msra.mxu0 0.0
    %594 = vmatprep.subr.mxu0 0.0
    %595 = vmatpush2.msra.mxu0 0.0
    %596 = vmatprep.subr.mxu0 0.0
    %597 = vmatpush2.msra.mxu0 0.0
    %598 = vmatprep.subr.mxu0 0.0
    %599 = vmatpush2.msra.mxu0 0.0
    %600 = vmatprep.subr.mxu0 0.0
    %601 = vmatpush2.msra.mxu0 0.0
    %602 = vmatprep.subr.mxu0 0.0
    %603 = vmatpush2.msra.mxu0 0.0
    %604 = vmatprep.subr.mxu0 0.0
    %605 = vmatpush2.msra.mxu0 0.0
    %606 = vmatprep.subr.mxu0 0.0
    %607 = vmatpush2.msra.mxu0 0.0
    %608 = vmatprep.subr.mxu0 0.0
    %609 = vmatpush2.msra.mxu0 0.0
    %610 = vmatprep.subr.mxu0 0.0
    %611 = vmatpush2.msra.mxu0 0.0
    %612 = vmatprep.subr.mxu0 0.0
    %613 = vmatpush2.msra.mxu0 0.0
    %614 = vmatprep.subr.mxu0 0.0
    %615 = vmatpush2.msra.mxu0 0.0
    %616 = vmatprep.mubr.f32.mxu0 0.0
    %617 = vmatmul.mubr.f32.gmra.mxu0 %v551
    %v618 = vpop.f32.mrf.mxu0
    %v619 = vadd.f32 0.0, %v618
    %v620 = vpop.f32.mrf.mxu0
    %v621 = vadd.f32 0.0, %v620
    %622 = vdwg.mxu0
    %623 = vmatprep.subr.mxu0 %v381
    %624 = vmatpush1.msra.mxu0 %v380
    %625 = vmatprep.subr.mxu0 %v377
    %626 = vmatpush1.msra.mxu0 %v376
    %627 = vmatprep.subr.mxu0 %v373
    %628 = vmatpush1.msra.mxu0 %v372
    %629 = vmatprep.subr.mxu0 %v369
    %630 = vmatpush1.msra.mxu0 %v368
    %631 = vmatprep.subr.mxu0 %v365
    %632 = vmatpush1.msra.mxu0 %v364
    %633 = vmatprep.subr.mxu0 %v361
    %634 = vmatpush1.msra.mxu0 %v360
    %635 = vmatprep.subr.mxu0 %v357
    %636 = vmatpush1.msra.mxu0 %v356
    %637 = vmatprep.subr.mxu0 %v353
    %638 = vmatpush1.msra.mxu0 %v352
    %639 = vmatprep.subr.mxu0 %v349
    %640 = vmatpush1.msra.mxu0 %v348
    %641 = vmatprep.subr.mxu0 %v345
    %642 = vmatpush1.msra.mxu0 %v344
    %643 = vmatprep.subr.mxu0 %v341
    %644 = vmatpush1.msra.mxu0 %v340
    %645 = vmatprep.subr.mxu0 %v337
    %646 = vmatpush1.msra.mxu0 %v336
    %647 = vmatprep.subr.mxu0 %v333
    %648 = vmatpush1.msra.mxu0 %v332
    %649 = vmatprep.subr.mxu0 %v329
    %650 = vmatpush1.msra.mxu0 %v328
    %651 = vmatprep.subr.mxu0 %v325
    %652 = vmatpush1.msra.mxu0 %v324
    %653 = vmatprep.subr.mxu0 %v321
    %654 = vmatpush1.msra.mxu0 %v320
    %655 = vmatprep.subr.mxu0 0.0
    %656 = vmatpush2.msra.mxu0 0.0
    %657 = vmatprep.subr.mxu0 0.0
    %658 = vmatpush2.msra.mxu0 0.0
    %659 = vmatprep.subr.mxu0 0.0
    %660 = vmatpush2.msra.mxu0 0.0
    %661 = vmatprep.subr.mxu0 0.0
    %662 = vmatpush2.msra.mxu0 0.0
    %663 = vmatprep.subr.mxu0 0.0
    %664 = vmatpush2.msra.mxu0 0.0
    %665 = vmatprep.subr.mxu0 0.0
    %666 = vmatpush2.msra.mxu0 0.0
    %667 = vmatprep.subr.mxu0 0.0
    %668 = vmatpush2.msra.mxu0 0.0
    %669 = vmatprep.subr.mxu0 0.0
    %670 = vmatpush2.msra.mxu0 0.0
    %671 = vmatprep.subr.mxu0 0.0
    %672 = vmatpush2.msra.mxu0 0.0
    %673 = vmatprep.subr.mxu0 0.0
    %674 = vmatpush2.msra.mxu0 0.0
    %675 = vmatprep.subr.mxu0 0.0
    %676 = vmatpush2.msra.mxu0 0.0
    %677 = vmatprep.subr.mxu0 0.0
    %678 = vmatpush2.msra.mxu0 0.0
    %679 = vmatprep.subr.mxu0 0.0
    %680 = vmatpush2.msra.mxu0 0.0
    %681 = vmatprep.subr.mxu0 0.0
    %682 = vmatpush2.msra.mxu0 0.0
    %683 = vmatprep.subr.mxu0 0.0
    %684 = vmatpush2.msra.mxu0 0.0
    %685 = vmatprep.subr.mxu0 0.0
    %686 = vmatpush2.msra.mxu0 0.0
    %687 = vmatprep.mubr.f32.mxu0 0.0
    %688 = vmatmul.mubr.f32.gmra.mxu0 %v551
    %v689 = vpop.f32.mrf.mxu0
    %v690 = vadd.f32 0.0, %v689
    %v691 = vpop.f32.mrf.mxu0
    %v692 = vadd.f32 0.0, %v691
    %693 = vdwg.mxu0
    %v694 = vadd.f32 %v278, %v619
    %v695 = vadd.f32 %v279, %v621
    %v696 = vadd.f32 %v280, %v690
    %v697 = vadd.f32 %v281, %v692
    %v698 = vxor.u32 %v694, 2147483648
    %v699 = vmul.f32 %v698, 1.442695
    %v700 = vpow.pop %v699
    %v701 = vadd.f32 %v700, 1.0
    %v702 = vrcp.pop %v701
    %v703 = vmul.f32 1.0, %v702
    %v704 = vxor.u32 %v695, 2147483648
    %v705 = vmul.f32 %v704, 1.442695
    %v706 = vpow.pop %v705
    %v707 = vadd.f32 %v706, 1.0
    %v708 = vrcp.pop %v707
    %v709 = vmul.f32 1.0, %v708
    %v710 = vtanh.pop %v696
    %v711 = vxor.u32 %v697, 2147483648
    %v712 = vmul.f32 %v711, 1.442695
    %v713 = vpow.pop %v712
    %v714 = vadd.f32 %v713, 1.0
    %v715 = vrcp.pop %v714
    %v716 = vmul.f32 1.0, %v715
    %v717 = vmul.f32 %v709, %v549
    %v718 = vmul.f32 %v703, %v710
    %v719 = vadd.f32 %v717, %v718
    %v720 = vtanh.pop %v719
    %v721 = vmul.f32 %v716, %v720
    %722 = vmatprep.subr.mxu0 %v379
    %723 = vmatpush1.msra.mxu0 %v378
    %724 = vmatprep.subr.mxu0 %v375
    %725 = vmatpush1.msra.mxu0 %v374
    %726 = vmatprep.subr.mxu0 %v371
    %727 = vmatpush1.msra.mxu0 %v370
    %728 = vmatprep.subr.mxu0 %v367
    %729 = vmatpush1.msra.mxu0 %v366
    %730 = vmatprep.subr.mxu0 %v363
    %731 = vmatpush1.msra.mxu0 %v362
    %732 = vmatprep.subr.mxu0 %v359
    %733 = vmatpush1.msra.mxu0 %v358
    %734 = vmatprep.subr.mxu0 %v355
    %735 = vmatpush1.msra.mxu0 %v354
    %736 = vmatprep.subr.mxu0 %v351
    %737 = vmatpush1.msra.mxu0 %v350
    %738 = vmatprep.subr.mxu0 %v347
    %739 = vmatpush1.msra.mxu0 %v346
    %740 = vmatprep.subr.mxu0 %v343
    %741 = vmatpush1.msra.mxu0 %v342
    %742 = vmatprep.subr.mxu0 %v339
    %743 = vmatpush1.msra.mxu0 %v338
    %744 = vmatprep.subr.mxu0 %v335
    %745 = vmatpush1.msra.mxu0 %v334
    %746 = vmatprep.subr.mxu0 %v331
    %747 = vmatpush1.msra.mxu0 %v330
    %748 = vmatprep.subr.mxu0 %v327
    %749 = vmatpush1.msra.mxu0 %v326
    %750 = vmatprep.subr.mxu0 %v323
    %751 = vmatpush1.msra.mxu0 %v322
    %752 = vmatprep.subr.mxu0 %v319
    %753 = vmatpush1.msra.mxu0 %v318
    %754 = vmatprep.subr.mxu0 0.0
    %755 = vmatpush2.msra.mxu0 0.0
    %756 = vmatprep.subr.mxu0 0.0
    %757 = vmatpush2.msra.mxu0 0.0
    %758 = vmatprep.subr.mxu0 0.0
    %759 = vmatpush2.msra.mxu0 0.0
    %760 = vmatprep.subr.mxu0 0.0
    %761 = vmatpush2.msra.mxu0 0.0
    %762 = vmatprep.subr.mxu0 0.0
    %763 = vmatpush2.msra.mxu0 0.0
    %764 = vmatprep.subr.mxu0 0.0
    %765 = vmatpush2.msra.mxu0 0.0
    %766 = vmatprep.subr.mxu0 0.0
    %767 = vmatpush2.msra.mxu0 0.0
    %768 = vmatprep.subr.mxu0 0.0
    %769 = vmatpush2.msra.mxu0 0.0
    %770 = vmatprep.subr.mxu0 0.0
    %771 = vmatpush2.msra.mxu0 0.0
    %772 = vmatprep.subr.mxu0 0.0
    %773 = vmatpush2.msra.mxu0 0.0
    %774 = vmatprep.subr.mxu0 0.0
    %775 = vmatpush2.msra.mxu0 0.0
    %776 = vmatprep.subr.mxu0 0.0
    %777 = vmatpush2.msra.mxu0 0.0
    %778 = vmatprep.subr.mxu0 0.0
    %779 = vmatpush2.msra.mxu0 0.0
    %780 = vmatprep.subr.mxu0 0.0
    %781 = vmatpush2.msra.mxu0 0.0
    %782 = vmatprep.subr.mxu0 0.0
    %783 = vmatpush2.msra.mxu0 0.0
    %784 = vmatprep.subr.mxu0 0.0
    %785 = vmatpush2.msra.mxu0 0.0
    %786 = vmatprep.mubr.f32.mxu0 0.0
    %787 = vmatmul.mubr.f32.gmra.mxu0 %v721
    %v788 = vpop.f32.mrf.mxu0
    %v789 = vadd.f32 0.0, %v788
    %v790 = vpop.f32.mrf.mxu0
    %v791 = vadd.f32 0.0, %v790
    %792 = vdwg.mxu0
    %793 = vmatprep.subr.mxu0 %v381
    %794 = vmatpush1.msra.mxu0 %v380
    %795 = vmatprep.subr.mxu0 %v377
    %796 = vmatpush1.msra.mxu0 %v376
    %797 = vmatprep.subr.mxu0 %v373
    %798 = vmatpush1.msra.mxu0 %v372
    %799 = vmatprep.subr.mxu0 %v369
    %800 = vmatpush1.msra.mxu0 %v368
    %801 = vmatprep.subr.mxu0 %v365
    %802 = vmatpush1.msra.mxu0 %v364
    %803 = vmatprep.subr.mxu0 %v361
    %804 = vmatpush1.msra.mxu0 %v360
    %805 = vmatprep.subr.mxu0 %v357
    %806 = vmatpush1.msra.mxu0 %v356
    %807 = vmatprep.subr.mxu0 %v353
    %808 = vmatpush1.msra.mxu0 %v352
    %809 = vmatprep.subr.mxu0 %v349
    %810 = vmatpush1.msra.mxu0 %v348
    %811 = vmatprep.subr.mxu0 %v345
    %812 = vmatpush1.msra.mxu0 %v344
    %813 = vmatprep.subr.mxu0 %v341
    %814 = vmatpush1.msra.mxu0 %v340
    %815 = vmatprep.subr.mxu0 %v337
    %816 = vmatpush1.msra.mxu0 %v336
    %817 = vmatprep.subr.mxu0 %v333
    %818 = vmatpush1.msra.mxu0 %v332
    %819 = vmatprep.subr.mxu0 %v329
    %820 = vmatpush1.msra.mxu0 %v328
    %821 = vmatprep.subr.mxu0 %v325
    %822 = vmatpush1.msra.mxu0 %v324
    %823 = vmatprep.subr.mxu0 %v321
    %824 = vmatpush1.msra.mxu0 %v320
    %825 = vmatprep.subr.mxu0 0.0
    %826 = vmatpush2.msra.mxu0 0.0
    %827 = vmatprep.subr.mxu0 0.0
    %828 = vmatpush2.msra.mxu0 0.0
    %829 = vmatprep.subr.mxu0 0.0
    %830 = vmatpush2.msra.mxu0 0.0
    %831 = vmatprep.subr.mxu0 0.0
    %832 = vmatpush2.msra.mxu0 0.0
    %833 = vmatprep.subr.mxu0 0.0
    %834 = vmatpush2.msra.mxu0 0.0
    %835 = vmatprep.subr.mxu0 0.0
    %836 = vmatpush2.msra.mxu0 0.0
    %837 = vmatprep.subr.mxu0 0.0
    %838 = vmatpush2.msra.mxu0 0.0
    %839 = vmatprep.subr.mxu0 0.0
    %840 = vmatpush2.msra.mxu0 0.0
    %841 = vmatprep.subr.mxu0 0.0
    %842 = vmatpush2.msra.mxu0 0.0
    %843 = vmatprep.subr.mxu0 0.0
    %844 = vmatpush2.msra.mxu0 0.0
    %845 = vmatprep.subr.mxu0 0.0
    %846 = vmatpush2.msra.mxu0 0.0
    %847 = vmatprep.subr.mxu0 0.0
    %848 = vmatpush2.msra.mxu0 0.0
    %849 = vmatprep.subr.mxu0 0.0
    %850 = vmatpush2.msra.mxu0 0.0
    %851 = vmatprep.subr.mxu0 0.0
    %852 = vmatpush2.msra.mxu0 0.0
    %853 = vmatprep.subr.mxu0 0.0
    %854 = vmatpush2.msra.mxu0 0.0
    %855 = vmatprep.subr.mxu0 0.0
    %856 = vmatpush2.msra.mxu0 0.0
    %857 = vmatprep.mubr.f32.mxu0 0.0
    %858 = vmatmul.mubr.f32.gmra.mxu0 %v721
    %v859 = vpop.f32.mrf.mxu0
    %v860 = vadd.f32 0.0, %v859
    %v861 = vpop.f32.mrf.mxu0
    %v862 = vadd.f32 0.0, %v861
    %863 = vdwg.mxu0
    %v864 = vadd.f32 %v282, %v789
    %v865 = vadd.f32 %v283, %v791
    %v866 = vadd.f32 %v284, %v860
    %v867 = vadd.f32 %v285, %v862
    %v868 = vxor.u32 %v864, 2147483648
    %v869 = vmul.f32 %v868, 1.442695
    %v870 = vpow.pop %v869
    %v871 = vadd.f32 %v870, 1.0
    %v872 = vrcp.pop %v871
    %v873 = vmul.f32 1.0, %v872
    %v874 = vxor.u32 %v865, 2147483648
    %v875 = vmul.f32 %v874, 1.442695
    %v876 = vpow.pop %v875
    %v877 = vadd.f32 %v876, 1.0
    %v878 = vrcp.pop %v877
    %v879 = vmul.f32 1.0, %v878
    %v880 = vtanh.pop %v866
    %v881 = vxor.u32 %v867, 2147483648
    %v882 = vmul.f32 %v881, 1.442695
    %v883 = vpow.pop %v882
    %v884 = vadd.f32 %v883, 1.0
    %v885 = vrcp.pop %v884
    %v886 = vmul.f32 1.0, %v885
    %v887 = vmul.f32 %v879, %v719
    %v888 = vmul.f32 %v873, %v880
    %v889 = vadd.f32 %v887, %v888
    %v890 = vtanh.pop %v889
    %v891 = vmul.f32 %v886, %v890
    %892 = vmatprep.subr.mxu0 %v379
    %893 = vmatpush1.msra.mxu0 %v378
    %894 = vmatprep.subr.mxu0 %v375
    %895 = vmatpush1.msra.mxu0 %v374
    %896 = vmatprep.subr.mxu0 %v371
    %897 = vmatpush1.msra.mxu0 %v370
    %898 = vmatprep.subr.mxu0 %v367
    %899 = vmatpush1.msra.mxu0 %v366
    %900 = vmatprep.subr.mxu0 %v363
    %901 = vmatpush1.msra.mxu0 %v362
    %902 = vmatprep.subr.mxu0 %v359
    %903 = vmatpush1.msra.mxu0 %v358
    %904 = vmatprep.subr.mxu0 %v355
    %905 = vmatpush1.msra.mxu0 %v354
    %906 = vmatprep.subr.mxu0 %v351
    %907 = vmatpush1.msra.mxu0 %v350
    %908 = vmatprep.subr.mxu0 %v347
    %909 = vmatpush1.msra.mxu0 %v346
    %910 = vmatprep.subr.mxu0 %v343
    %911 = vmatpush1.msra.mxu0 %v342
    %912 = vmatprep.subr.mxu0 %v339
    %913 = vmatpush1.msra.mxu0 %v338
    %914 = vmatprep.subr.mxu0 %v335
    %915 = vmatpush1.msra.mxu0 %v334
    %916 = vmatprep.subr.mxu0 %v331
    %917 = vmatpush1.msra.mxu0 %v330
    %918 = vmatprep.subr.mxu0 %v327
    %919 = vmatpush1.msra.mxu0 %v326
    %920 = vmatprep.subr.mxu0 %v323
    %921 = vmatpush1.msra.mxu0 %v322
    %922 = vmatprep.subr.mxu0 %v319
    %923 = vmatpush1.msra.mxu0 %v318
    %924 = vmatprep.subr.mxu0 0.0
    %925 = vmatpush2.msra.mxu0 0.0
    %926 = vmatprep.subr.mxu0 0.0
    %927 = vmatpush2.msra.mxu0 0.0
    %928 = vmatprep.subr.mxu0 0.0
    %929 = vmatpush2.msra.mxu0 0.0
    %930 = vmatprep.subr.mxu0 0.0
    %931 = vmatpush2.msra.mxu0 0.0
    %932 = vmatprep.subr.mxu0 0.0
    %933 = vmatpush2.msra.mxu0 0.0
    %934 = vmatprep.subr.mxu0 0.0
    %935 = vmatpush2.msra.mxu0 0.0
    %936 = vmatprep.subr.mxu0 0.0
    %937 = vmatpush2.msra.mxu0 0.0
    %938 = vmatprep.subr.mxu0 0.0
    %939 = vmatpush2.msra.mxu0 0.0
    %940 = vmatprep.subr.mxu0 0.0
    %941 = vmatpush2.msra.mxu0 0.0
    %942 = vmatprep.subr.mxu0 0.0
    %943 = vmatpush2.msra.mxu0 0.0
    %944 = vmatprep.subr.mxu0 0.0
    %945 = vmatpush2.msra.mxu0 0.0
    %946 = vmatprep.subr.mxu0 0.0
    %947 = vmatpush2.msra.mxu0 0.0
    %948 = vmatprep.subr.mxu0 0.0
    %949 = vmatpush2.msra.mxu0 0.0
    %950 = vmatprep.subr.mxu0 0.0
    %951 = vmatpush2.msra.mxu0 0.0
    %952 = vmatprep.subr.mxu0 0.0
    %953 = vmatpush2.msra.mxu0 0.0
    %954 = vmatprep.subr.mxu0 0.0
    %955 = vmatpush2.msra.mxu0 0.0
    %956 = vmatprep.mubr.f32.mxu0 0.0
    %957 = vmatmul.mubr.f32.gmra.mxu0 %v891
    %v958 = vpop.f32.mrf.mxu0
    %v959 = vadd.f32 0.0, %v958
    %v960 = vpop.f32.mrf.mxu0
    %v961 = vadd.f32 0.0, %v960
    %962 = vdwg.mxu0
    %963 = vmatprep.subr.mxu0 %v381
    %964 = vmatpush1.msra.mxu0 %v380
    %965 = vmatprep.subr.mxu0 %v377
    %966 = vmatpush1.msra.mxu0 %v376
    %967 = vmatprep.subr.mxu0 %v373
    %968 = vmatpush1.msra.mxu0 %v372
    %969 = vmatprep.subr.mxu0 %v369
    %970 = vmatpush1.msra.mxu0 %v368
    %971 = vmatprep.subr.mxu0 %v365
    %972 = vmatpush1.msra.mxu0 %v364
    %973 = vmatprep.subr.mxu0 %v361
    %974 = vmatpush1.msra.mxu0 %v360
    %975 = vmatprep.subr.mxu0 %v357
    %976 = vmatpush1.msra.mxu0 %v356
    %977 = vmatprep.subr.mxu0 %v353
    %978 = vmatpush1.msra.mxu0 %v352
    %979 = vmatprep.subr.mxu0 %v349
    %980 = vmatpush1.msra.mxu0 %v348
    %981 = vmatprep.subr.mxu0 %v345
    %982 = vmatpush1.msra.mxu0 %v344
    %983 = vmatprep.subr.mxu0 %v341
    %984 = vmatpush1.msra.mxu0 %v340
    %985 = vmatprep.subr.mxu0 %v337
    %986 = vmatpush1.msra.mxu0 %v336
    %987 = vmatprep.subr.mxu0 %v333
    %988 = vmatpush1.msra.mxu0 %v332
    %989 = vmatprep.subr.mxu0 %v329
    %990 = vmatpush1.msra.mxu0 %v328
    %991 = vmatprep.subr.mxu0 %v325
    %992 = vmatpush1.msra.mxu0 %v324
    %993 = vmatprep.subr.mxu0 %v321
    %994 = vmatpush1.msra.mxu0 %v320
    %995 = vmatprep.subr.mxu0 0.0
    %996 = vmatpush2.msra.mxu0 0.0
    %997 = vmatprep.subr.mxu0 0.0
    %998 = vmatpush2.msra.mxu0 0.0
    %999 = vmatprep.subr.mxu0 0.0
    %1000 = vmatpush2.msra.mxu0 0.0
    %1001 = vmatprep.subr.mxu0 0.0
    %1002 = vmatpush2.msra.mxu0 0.0
    %1003 = vmatprep.subr.mxu0 0.0
    %1004 = vmatpush2.msra.mxu0 0.0
    %1005 = vmatprep.subr.mxu0 0.0
    %1006 = vmatpush2.msra.mxu0 0.0
    %1007 = vmatprep.subr.mxu0 0.0
    %1008 = vmatpush2.msra.mxu0 0.0
    %1009 = vmatprep.subr.mxu0 0.0
    %1010 = vmatpush2.msra.mxu0 0.0
    %1011 = vmatprep.subr.mxu0 0.0
    %1012 = vmatpush2.msra.mxu0 0.0
    %1013 = vmatprep.subr.mxu0 0.0
    %1014 = vmatpush2.msra.mxu0 0.0
    %1015 = vmatprep.subr.mxu0 0.0
    %1016 = vmatpush2.msra.mxu0 0.0
    %1017 = vmatprep.subr.mxu0 0.0
    %1018 = vmatpush2.msra.mxu0 0.0
    %1019 = vmatprep.subr.mxu0 0.0
    %1020 = vmatpush2.msra.mxu0 0.0
    %1021 = vmatprep.subr.mxu0 0.0
    %1022 = vmatpush2.msra.mxu0 0.0
    %1023 = vmatprep.subr.mxu0 0.0
    %1024 = vmatpush2.msra.mxu0 0.0
    %1025 = vmatprep.subr.mxu0 0.0
    %1026 = vmatpush2.msra.mxu0 0.0
    %1027 = vmatprep.mubr.f32.mxu0 0.0
    %1028 = vmatmul.mubr.f32.gmra.mxu0 %v891
    %v1029 = vpop.f32.mrf.mxu0
    %v1030 = vadd.f32 0.0, %v1029
    %v1031 = vpop.f32.mrf.mxu0
    %v1032 = vadd.f32 0.0, %v1031
    %1033 = vdwg.mxu0
    %v1034 = vadd.f32 %v286, %v959
    %v1035 = vadd.f32 %v287, %v961
    %v1036 = vadd.f32 %v288, %v1030
    %v1037 = vadd.f32 %v289, %v1032
    %v1038 = vxor.u32 %v1034, 2147483648
    %v1039 = vmul.f32 %v1038, 1.442695
    %v1040 = vpow.pop %v1039
    %v1041 = vadd.f32 %v1040, 1.0
    %v1042 = vrcp.pop %v1041
    %v1043 = vmul.f32 1.0, %v1042
    %v1044 = vxor.u32 %v1035, 2147483648
    %v1045 = vmul.f32 %v1044, 1.442695
    %v1046 = vpow.pop %v1045
    %v1047 = vadd.f32 %v1046, 1.0
    %v1048 = vrcp.pop %v1047
    %v1049 = vmul.f32 1.0, %v1048
    %v1050 = vtanh.pop %v1036
    %v1051 = vxor.u32 %v1037, 2147483648
    %v1052 = vmul.f32 %v1051, 1.442695
    %v1053 = vpow.pop %v1052
    %v1054 = vadd.f32 %v1053, 1.0
    %v1055 = vrcp.pop %v1054
    %v1056 = vmul.f32 1.0, %v1055
    %v1057 = vmul.f32 %v1049, %v889
    %v1058 = vmul.f32 %v1043, %v1050
    %v1059 = vadd.f32 %v1057, %v1058
    %v1060 = vtanh.pop %v1059
    %v1061 = vmul.f32 %v1056, %v1060
    %1062 = vmatprep.subr.mxu0 %v379
    %1063 = vmatpush1.msra.mxu0 %v378
    %1064 = vmatprep.subr.mxu0 %v375
    %1065 = vmatpush1.msra.mxu0 %v374
    %1066 = vmatprep.subr.mxu0 %v371
    %1067 = vmatpush1.msra.mxu0 %v370
    %1068 = vmatprep.subr.mxu0 %v367
    %1069 = vmatpush1.msra.mxu0 %v366
    %1070 = vmatprep.subr.mxu0 %v363
    %1071 = vmatpush1.msra.mxu0 %v362
    %1072 = vmatprep.subr.mxu0 %v359
    %1073 = vmatpush1.msra.mxu0 %v358
    %1074 = vmatprep.subr.mxu0 %v355
    %1075 = vmatpush1.msra.mxu0 %v354
    %1076 = vmatprep.subr.mxu0 %v351
    %1077 = vmatpush1.msra.mxu0 %v350
    %1078 = vmatprep.subr.mxu0 %v347
    %1079 = vmatpush1.msra.mxu0 %v346
    %1080 = vmatprep.subr.mxu0 %v343
    %1081 = vmatpush1.msra.mxu0 %v342
    %1082 = vmatprep.subr.mxu0 %v339
    %1083 = vmatpush1.msra.mxu0 %v338
    %1084 = vmatprep.subr.mxu0 %v335
    %1085 = vmatpush1.msra.mxu0 %v334
    %1086 = vmatprep.subr.mxu0 %v331
    %1087 = vmatpush1.msra.mxu0 %v330
    %1088 = vmatprep.subr.mxu0 %v327
    %1089 = vmatpush1.msra.mxu0 %v326
    %1090 = vmatprep.subr.mxu0 %v323
    %1091 = vmatpush1.msra.mxu0 %v322
    %1092 = vmatprep.subr.mxu0 %v319
    %1093 = vmatpush1.msra.mxu0 %v318
    %1094 = vmatprep.subr.mxu0 0.0
    %1095 = vmatpush2.msra.mxu0 0.0
    %1096 = vmatprep.subr.mxu0 0.0
    %1097 = vmatpush2.msra.mxu0 0.0
    %1098 = vmatprep.subr.mxu0 0.0
    %1099 = vmatpush2.msra.mxu0 0.0
    %1100 = vmatprep.subr.mxu0 0.0
    %1101 = vmatpush2.msra.mxu0 0.0
    %1102 = vmatprep.subr.mxu0 0.0
    %1103 = vmatpush2.msra.mxu0 0.0
    %1104 = vmatprep.subr.mxu0 0.0
    %1105 = vmatpush2.msra.mxu0 0.0
    %1106 = vmatprep.subr.mxu0 0.0
    %1107 = vmatpush2.msra.mxu0 0.0
    %1108 = vmatprep.subr.mxu0 0.0
    %1109 = vmatpush2.msra.mxu0 0.0
    %1110 = vmatprep.subr.mxu0 0.0
    %1111 = vmatpush2.msra.mxu0 0.0
    %1112 = vmatprep.subr.mxu0 0.0
    %1113 = vmatpush2.msra.mxu0 0.0
    %1114 = vmatprep.subr.mxu0 0.0
    %1115 = vmatpush2.msra.mxu0 0.0
    %1116 = vmatprep.subr.mxu0 0.0
    %1117 = vmatpush2.msra.mxu0 0.0
    %1118 = vmatprep.subr.mxu0 0.0
    %1119 = vmatpush2.msra.mxu0 0.0
    %1120 = vmatprep.subr.mxu0 0.0
    %1121 = vmatpush2.msra.mxu0 0.0
    %1122 = vmatprep.subr.mxu0 0.0
    %1123 = vmatpush2.msra.mxu0 0.0
    %1124 = vmatprep.subr.mxu0 0.0
    %1125 = vmatpush2.msra.mxu0 0.0
    %1126 = vmatprep.mubr.f32.mxu0 0.0
    %1127 = vmatmul.mubr.f32.gmra.mxu0 %v1061
    %v1128 = vpop.f32.mrf.mxu0
    %v1129 = vadd.f32 0.0, %v1128
    %v1130 = vpop.f32.mrf.mxu0
    %v1131 = vadd.f32 0.0, %v1130
    %1132 = vdwg.mxu0
    %1133 = vmatprep.subr.mxu0 %v381
    %1134 = vmatpush1.msra.mxu0 %v380
    %1135 = vmatprep.subr.mxu0 %v377
    %1136 = vmatpush1.msra.mxu0 %v376
    %1137 = vmatprep.subr.mxu0 %v373
    %1138 = vmatpush1.msra.mxu0 %v372
    %1139 = vmatprep.subr.mxu0 %v369
    %1140 = vmatpush1.msra.mxu0 %v368
    %1141 = vmatprep.subr.mxu0 %v365
    %1142 = vmatpush1.msra.mxu0 %v364
    %1143 = vmatprep.subr.mxu0 %v361
    %1144 = vmatpush1.msra.mxu0 %v360
    %1145 = vmatprep.subr.mxu0 %v357
    %1146 = vmatpush1.msra.mxu0 %v356
    %1147 = vmatprep.subr.mxu0 %v353
    %1148 = vmatpush1.msra.mxu0 %v352
    %1149 = vmatprep.subr.mxu0 %v349
    %1150 = vmatpush1.msra.mxu0 %v348
    %1151 = vmatprep.subr.mxu0 %v345
    %1152 = vmatpush1.msra.mxu0 %v344
    %1153 = vmatprep.subr.mxu0 %v341
    %1154 = vmatpush1.msra.mxu0 %v340
    %1155 = vmatprep.subr.mxu0 %v337
    %1156 = vmatpush1.msra.mxu0 %v336
    %1157 = vmatprep.subr.mxu0 %v333
    %1158 = vmatpush1.msra.mxu0 %v332
    %1159 = vmatprep.subr.mxu0 %v329
    %1160 = vmatpush1.msra.mxu0 %v328
    %1161 = vmatprep.subr.mxu0 %v325
    %1162 = vmatpush1.msra.mxu0 %v324
    %1163 = vmatprep.subr.mxu0 %v321
    %1164 = vmatpush1.msra.mxu0 %v320
    %1165 = vmatprep.subr.mxu0 0.0
    %1166 = vmatpush2.msra.mxu0 0.0
    %1167 = vmatprep.subr.mxu0 0.0
    %1168 = vmatpush2.msra.mxu0 0.0
    %1169 = vmatprep.subr.mxu0 0.0
    %1170 = vmatpush2.msra.mxu0 0.0
    %1171 = vmatprep.subr.mxu0 0.0
    %1172 = vmatpush2.msra.mxu0 0.0
    %1173 = vmatprep.subr.mxu0 0.0
    %1174 = vmatpush2.msra.mxu0 0.0
    %1175 = vmatprep.subr.mxu0 0.0
    %1176 = vmatpush2.msra.mxu0 0.0
    %1177 = vmatprep.subr.mxu0 0.0
    %1178 = vmatpush2.msra.mxu0 0.0
    %1179 = vmatprep.subr.mxu0 0.0
    %1180 = vmatpush2.msra.mxu0 0.0
    %1181 = vmatprep.subr.mxu0 0.0
    %1182 = vmatpush2.msra.mxu0 0.0
    %1183 = vmatprep.subr.mxu0 0.0
    %1184 = vmatpush2.msra.mxu0 0.0
    %1185 = vmatprep.subr.mxu0 0.0
    %1186 = vmatpush2.msra.mxu0 0.0
    %1187 = vmatprep.subr.mxu0 0.0
    %1188 = vmatpush2.msra.mxu0 0.0
    %1189 = vmatprep.subr.mxu0 0.0
    %1190 = vmatpush2.msra.mxu0 0.0
    %1191 = vmatprep.subr.mxu0 0.0
    %1192 = vmatpush2.msra.mxu0 0.0
    %1193 = vmatprep.subr.mxu0 0.0
    %1194 = vmatpush2.msra.mxu0 0.0
    %1195 = vmatprep.subr.mxu0 0.0
    %1196 = vmatpush2.msra.mxu0 0.0
    %1197 = vmatprep.mubr.f32.mxu0 0.0
    %1198 = vmatmul.mubr.f32.gmra.mxu0 %v1061
    %v1199 = vpop.f32.mrf.mxu0
    %v1200 = vadd.f32 0.0, %v1199
    %v1201 = vpop.f32.mrf.mxu0
    %v1202 = vadd.f32 0.0, %v1201
    %1203 = vdwg.mxu0
    %v1204 = vadd.f32 %v290, %v1129
    %v1205 = vadd.f32 %v291, %v1131
    %v1206 = vadd.f32 %v292, %v1200
    %v1207 = vadd.f32 %v293, %v1202
    %v1208 = vxor.u32 %v1204, 2147483648
    %v1209 = vmul.f32 %v1208, 1.442695
    %v1210 = vpow.pop %v1209
    %v1211 = vadd.f32 %v1210, 1.0
    %v1212 = vrcp.pop %v1211
    %v1213 = vmul.f32 1.0, %v1212
    %v1214 = vxor.u32 %v1205, 2147483648
    %v1215 = vmul.f32 %v1214, 1.442695
    %v1216 = vpow.pop %v1215
    %v1217 = vadd.f32 %v1216, 1.0
    %v1218 = vrcp.pop %v1217
    %v1219 = vmul.f32 1.0, %v1218
    %v1220 = vtanh.pop %v1206
    %v1221 = vxor.u32 %v1207, 2147483648
    %v1222 = vmul.f32 %v1221, 1.442695
    %v1223 = vpow.pop %v1222
    %v1224 = vadd.f32 %v1223, 1.0
    %v1225 = vrcp.pop %v1224
    %v1226 = vmul.f32 1.0, %v1225
    %v1227 = vmul.f32 %v1219, %v1059
    %v1228 = vmul.f32 %v1213, %v1220
    %v1229 = vadd.f32 %v1227, %v1228
    %v1230 = vtanh.pop %v1229
    %v1231 = vmul.f32 %v1226, %v1230
    %1232 = vmatprep.subr.mxu0 %v379
    %1233 = vmatpush1.msra.mxu0 %v378
    %1234 = vmatprep.subr.mxu0 %v375
    %1235 = vmatpush1.msra.mxu0 %v374
    %1236 = vmatprep.subr.mxu0 %v371
    %1237 = vmatpush1.msra.mxu0 %v370
    %1238 = vmatprep.subr.mxu0 %v367
    %1239 = vmatpush1.msra.mxu0 %v366
    %1240 = vmatprep.subr.mxu0 %v363
    %1241 = vmatpush1.msra.mxu0 %v362
    %1242 = vmatprep.subr.mxu0 %v359
    %1243 = vmatpush1.msra.mxu0 %v358
    %1244 = vmatprep.subr.mxu0 %v355
    %1245 = vmatpush1.msra.mxu0 %v354
    %1246 = vmatprep.subr.mxu0 %v351
    %1247 = vmatpush1.msra.mxu0 %v350
    %1248 = vmatprep.subr.mxu0 %v347
    %1249 = vmatpush1.msra.mxu0 %v346
    %1250 = vmatprep.subr.mxu0 %v343
    %1251 = vmatpush1.msra.mxu0 %v342
    %1252 = vmatprep.subr.mxu0 %v339
    %1253 = vmatpush1.msra.mxu0 %v338
    %1254 = vmatprep.subr.mxu0 %v335
    %1255 = vmatpush1.msra.mxu0 %v334
    %1256 = vmatprep.subr.mxu0 %v331
    %1257 = vmatpush1.msra.mxu0 %v330
    %1258 = vmatprep.subr.mxu0 %v327
    %1259 = vmatpush1.msra.mxu0 %v326
    %1260 = vmatprep.subr.mxu0 %v323
    %1261 = vmatpush1.msra.mxu0 %v322
    %1262 = vmatprep.subr.mxu0 %v319
    %1263 = vmatpush1.msra.mxu0 %v318
    %1264 = vmatprep.subr.mxu0 0.0
    %1265 = vmatpush2.msra.mxu0 0.0
    %1266 = vmatprep.subr.mxu0 0.0
    %1267 = vmatpush2.msra.mxu0 0.0
    %1268 = vmatprep.subr.mxu0 0.0
    %1269 = vmatpush2.msra.mxu0 0.0
    %1270 = vmatprep.subr.mxu0 0.0
    %1271 = vmatpush2.msra.mxu0 0.0
    %1272 = vmatprep.subr.mxu0 0.0
    %1273 = vmatpush2.msra.mxu0 0.0
    %1274 = vmatprep.subr.mxu0 0.0
    %1275 = vmatpush2.msra.mxu0 0.0
    %1276 = vmatprep.subr.mxu0 0.0
    %1277 = vmatpush2.msra.mxu0 0.0
    %1278 = vmatprep.subr.mxu0 0.0
    %1279 = vmatpush2.msra.mxu0 0.0
    %1280 = vmatprep.subr.mxu0 0.0
    %1281 = vmatpush2.msra.mxu0 0.0
    %1282 = vmatprep.subr.mxu0 0.0
    %1283 = vmatpush2.msra.mxu0 0.0
    %1284 = vmatprep.subr.mxu0 0.0
    %1285 = vmatpush2.msra.mxu0 0.0
    %1286 = vmatprep.subr.mxu0 0.0
    %1287 = vmatpush2.msra.mxu0 0.0
    %1288 = vmatprep.subr.mxu0 0.0
    %1289 = vmatpush2.msra.mxu0 0.0
    %1290 = vmatprep.subr.mxu0 0.0
    %1291 = vmatpush2.msra.mxu0 0.0
    %1292 = vmatprep.subr.mxu0 0.0
    %1293 = vmatpush2.msra.mxu0 0.0
    %1294 = vmatprep.subr.mxu0 0.0
    %1295 = vmatpush2.msra.mxu0 0.0
    %1296 = vmatprep.mubr.f32.mxu0 0.0
    %1297 = vmatmul.mubr.f32.gmra.mxu0 %v1231
    %v1298 = vpop.f32.mrf.mxu0
    %v1299 = vadd.f32 0.0, %v1298
    %v1300 = vpop.f32.mrf.mxu0
    %v1301 = vadd.f32 0.0, %v1300
    %1302 = vdwg.mxu0
    %1303 = vmatprep.subr.mxu0 %v381
    %1304 = vmatpush1.msra.mxu0 %v380
    %1305 = vmatprep.subr.mxu0 %v377
    %1306 = vmatpush1.msra.mxu0 %v376
    %1307 = vmatprep.subr.mxu0 %v373
    %1308 = vmatpush1.msra.mxu0 %v372
    %1309 = vmatprep.subr.mxu0 %v369
    %1310 = vmatpush1.msra.mxu0 %v368
    %1311 = vmatprep.subr.mxu0 %v365
    %1312 = vmatpush1.msra.mxu0 %v364
    %1313 = vmatprep.subr.mxu0 %v361
    %1314 = vmatpush1.msra.mxu0 %v360
    %1315 = vmatprep.subr.mxu0 %v357
    %1316 = vmatpush1.msra.mxu0 %v356
    %1317 = vmatprep.subr.mxu0 %v353
    %1318 = vmatpush1.msra.mxu0 %v352
    %1319 = vmatprep.subr.mxu0 %v349
    %1320 = vmatpush1.msra.mxu0 %v348
    %1321 = vmatprep.subr.mxu0 %v345
    %1322 = vmatpush1.msra.mxu0 %v344
    %1323 = vmatprep.subr.mxu0 %v341
    %1324 = vmatpush1.msra.mxu0 %v340
    %1325 = vmatprep.subr.mxu0 %v337
    %1326 = vmatpush1.msra.mxu0 %v336
    %1327 = vmatprep.subr.mxu0 %v333
    %1328 = vmatpush1.msra.mxu0 %v332
    %1329 = vmatprep.subr.mxu0 %v329
    %1330 = vmatpush1.msra.mxu0 %v328
    %1331 = vmatprep.subr.mxu0 %v325
    %1332 = vmatpush1.msra.mxu0 %v324
    %1333 = vmatprep.subr.mxu0 %v321
    %1334 = vmatpush1.msra.mxu0 %v320
    %1335 = vmatprep.subr.mxu0 0.0
    %1336 = vmatpush2.msra.mxu0 0.0
    %1337 = vmatprep.subr.mxu0 0.0
    %1338 = vmatpush2.msra.mxu0 0.0
    %1339 = vmatprep.subr.mxu0 0.0
    %1340 = vmatpush2.msra.mxu0 0.0
    %1341 = vmatprep.subr.mxu0 0.0
    %1342 = vmatpush2.msra.mxu0 0.0
    %1343 = vmatprep.subr.mxu0 0.0
    %1344 = vmatpush2.msra.mxu0 0.0
    %1345 = vmatprep.subr.mxu0 0.0
    %1346 = vmatpush2.msra.mxu0 0.0
    %1347 = vmatprep.subr.mxu0 0.0
    %1348 = vmatpush2.msra.mxu0 0.0
    %1349 = vmatprep.subr.mxu0 0.0
    %1350 = vmatpush2.msra.mxu0 0.0
    %1351 = vmatprep.subr.mxu0 0.0
    %1352 = vmatpush2.msra.mxu0 0.0
    %1353 = vmatprep.subr.mxu0 0.0
    %1354 = vmatpush2.msra.mxu0 0.0
    %1355 = vmatprep.subr.mxu0 0.0
    %1356 = vmatpush2.msra.mxu0 0.0
    %1357 = vmatprep.subr.mxu0 0.0
    %1358 = vmatpush2.msra.mxu0 0.0
    %1359 = vmatprep.subr.mxu0 0.0
    %1360 = vmatpush2.msra.mxu0 0.0
    %1361 = vmatprep.subr.mxu0 0.0
    %1362 = vmatpush2.msra.mxu0 0.0
    %1363 = vmatprep.subr.mxu0 0.0
    %1364 = vmatpush2.msra.mxu0 0.0
    %1365 = vmatprep.subr.mxu0 0.0
    %1366 = vmatpush2.msra.mxu0 0.0
    %1367 = vmatprep.mubr.f32.mxu0 0.0
    %1368 = vmatmul.mubr.f32.gmra.mxu0 %v1231
    %v1369 = vpop.f32.mrf.mxu0
    %v1370 = vadd.f32 0.0, %v1369
    %v1371 = vpop.f32.mrf.mxu0
    %v1372 = vadd.f32 0.0, %v1371
    %1373 = vdwg.mxu0
    %v1374 = vadd.f32 %v294, %v1299
    %v1375 = vadd.f32 %v295, %v1301
    %v1376 = vadd.f32 %v296, %v1370
    %v1377 = vadd.f32 %v297, %v1372
    %v1378 = vxor.u32 %v1374, 2147483648
    %v1379 = vmul.f32 %v1378, 1.442695
    %v1380 = vpow.pop %v1379
    %v1381 = vadd.f32 %v1380, 1.0
    %v1382 = vrcp.pop %v1381
    %v1383 = vmul.f32 1.0, %v1382
    %v1384 = vxor.u32 %v1375, 2147483648
    %v1385 = vmul.f32 %v1384, 1.442695
    %v1386 = vpow.pop %v1385
    %v1387 = vadd.f32 %v1386, 1.0
    %v1388 = vrcp.pop %v1387
    %v1389 = vmul.f32 1.0, %v1388
    %v1390 = vtanh.pop %v1376
    %v1391 = vxor.u32 %v1377, 2147483648
    %v1392 = vmul.f32 %v1391, 1.442695
    %v1393 = vpow.pop %v1392
    %v1394 = vadd.f32 %v1393, 1.0
    %v1395 = vrcp.pop %v1394
    %v1396 = vmul.f32 1.0, %v1395
    %v1397 = vmul.f32 %v1389, %v1229
    %v1398 = vmul.f32 %v1383, %v1390
    %v1399 = vadd.f32 %v1397, %v1398
    %v1400 = vtanh.pop %v1399
    %v1401 = vmul.f32 %v1396, %v1400
    %1402 = vmatprep.subr.mxu0 %v379
    %1403 = vmatpush1.msra.mxu0 %v378
    %1404 = vmatprep.subr.mxu0 %v375
    %1405 = vmatpush1.msra.mxu0 %v374
    %1406 = vmatprep.subr.mxu0 %v371
    %1407 = vmatpush1.msra.mxu0 %v370
    %1408 = vmatprep.subr.mxu0 %v367
    %1409 = vmatpush1.msra.mxu0 %v366
    %1410 = vmatprep.subr.mxu0 %v363
    %1411 = vmatpush1.msra.mxu0 %v362
    %1412 = vmatprep.subr.mxu0 %v359
    %1413 = vmatpush1.msra.mxu0 %v358
    %1414 = vmatprep.subr.mxu0 %v355
    %1415 = vmatpush1.msra.mxu0 %v354
    %1416 = vmatprep.subr.mxu0 %v351
    %1417 = vmatpush1.msra.mxu0 %v350
    %1418 = vmatprep.subr.mxu0 %v347
    %1419 = vmatpush1.msra.mxu0 %v346
    %1420 = vmatprep.subr.mxu0 %v343
    %1421 = vmatpush1.msra.mxu0 %v342
    %1422 = vmatprep.subr.mxu0 %v339
    %1423 = vmatpush1.msra.mxu0 %v338
    %1424 = vmatprep.subr.mxu0 %v335
    %1425 = vmatpush1.msra.mxu0 %v334
    %1426 = vmatprep.subr.mxu0 %v331
    %1427 = vmatpush1.msra.mxu0 %v330
    %1428 = vmatprep.subr.mxu0 %v327
    %1429 = vmatpush1.msra.mxu0 %v326
    %1430 = vmatprep.subr.mxu0 %v323
    %1431 = vmatpush1.msra.mxu0 %v322
    %1432 = vmatprep.subr.mxu0 %v319
    %1433 = vmatpush1.msra.mxu0 %v318
    %1434 = vmatprep.subr.mxu0 0.0
    %1435 = vmatpush2.msra.mxu0 0.0
    %1436 = vmatprep.subr.mxu0 0.0
    %1437 = vmatpush2.msra.mxu0 0.0
    %1438 = vmatprep.subr.mxu0 0.0
    %1439 = vmatpush2.msra.mxu0 0.0
    %1440 = vmatprep.subr.mxu0 0.0
    %1441 = vmatpush2.msra.mxu0 0.0
    %1442 = vmatprep.subr.mxu0 0.0
    %1443 = vmatpush2.msra.mxu0 0.0
    %1444 = vmatprep.subr.mxu0 0.0
    %1445 = vmatpush2.msra.mxu0 0.0
    %1446 = vmatprep.subr.mxu0 0.0
    %1447 = vmatpush2.msra.mxu0 0.0
    %1448 = vmatprep.subr.mxu0 0.0
    %1449 = vmatpush2.msra.mxu0 0.0
    %1450 = vmatprep.subr.mxu0 0.0
    %1451 = vmatpush2.msra.mxu0 0.0
    %1452 = vmatprep.subr.mxu0 0.0
    %1453 = vmatpush2.msra.mxu0 0.0
    %1454 = vmatprep.subr.mxu0 0.0
    %1455 = vmatpush2.msra.mxu0 0.0
    %1456 = vmatprep.subr.mxu0 0.0
    %1457 = vmatpush2.msra.mxu0 0.0
    %1458 = vmatprep.subr.mxu0 0.0
    %1459 = vmatpush2.msra.mxu0 0.0
    %1460 = vmatprep.subr.mxu0 0.0
    %1461 = vmatpush2.msra.mxu0 0.0
    %1462 = vmatprep.subr.mxu0 0.0
    %1463 = vmatpush2.msra.mxu0 0.0
    %1464 = vmatprep.subr.mxu0 0.0
    %1465 = vmatpush2.msra.mxu0 0.0
    %1466 = vmatprep.mubr.f32.mxu0 0.0
    %1467 = vmatmul.mubr.f32.gmra.mxu0 %v1401
    %v1468 = vpop.f32.mrf.mxu0
    %v1469 = vadd.f32 0.0, %v1468
    %v1470 = vpop.f32.mrf.mxu0
    %v1471 = vadd.f32 0.0, %v1470
    %1472 = vdwg.mxu0
    %1473 = vmatprep.subr.mxu0 %v381
    %1474 = vmatpush1.msra.mxu0 %v380
    %1475 = vmatprep.subr.mxu0 %v377
    %1476 = vmatpush1.msra.mxu0 %v376
    %1477 = vmatprep.subr.mxu0 %v373
    %1478 = vmatpush1.msra.mxu0 %v372
    %1479 = vmatprep.subr.mxu0 %v369
    %1480 = vmatpush1.msra.mxu0 %v368
    %1481 = vmatprep.subr.mxu0 %v365
    %1482 = vmatpush1.msra.mxu0 %v364
    %1483 = vmatprep.subr.mxu0 %v361
    %1484 = vmatpush1.msra.mxu0 %v360
    %1485 = vmatprep.subr.mxu0 %v357
    %1486 = vmatpush1.msra.mxu0 %v356
    %1487 = vmatprep.subr.mxu0 %v353
    %1488 = vmatpush1.msra.mxu0 %v352
    %1489 = vmatprep.subr.mxu0 %v349
    %1490 = vmatpush1.msra.mxu0 %v348
    %1491 = vmatprep.subr.mxu0 %v345
    %1492 = vmatpush1.msra.mxu0 %v344
    %1493 = vmatprep.subr.mxu0 %v341
    %1494 = vmatpush1.msra.mxu0 %v340
    %1495 = vmatprep.subr.mxu0 %v337
    %1496 = vmatpush1.msra.mxu0 %v336
    %1497 = vmatprep.subr.mxu0 %v333
    %1498 = vmatpush1.msra.mxu0 %v332
    %1499 = vmatprep.subr.mxu0 %v329
    %1500 = vmatpush1.msra.mxu0 %v328
    %1501 = vmatprep.subr.mxu0 %v325
    %1502 = vmatpush1.msra.mxu0 %v324
    %1503 = vmatprep.subr.mxu0 %v321
    %1504 = vmatpush1.msra.mxu0 %v320
    %1505 = vmatprep.subr.mxu0 0.0
    %1506 = vmatpush2.msra.mxu0 0.0
    %1507 = vmatprep.subr.mxu0 0.0
    %1508 = vmatpush2.msra.mxu0 0.0
    %1509 = vmatprep.subr.mxu0 0.0
    %1510 = vmatpush2.msra.mxu0 0.0
    %1511 = vmatprep.subr.mxu0 0.0
    %1512 = vmatpush2.msra.mxu0 0.0
    %1513 = vmatprep.subr.mxu0 0.0
    %1514 = vmatpush2.msra.mxu0 0.0
    %1515 = vmatprep.subr.mxu0 0.0
    %1516 = vmatpush2.msra.mxu0 0.0
    %1517 = vmatprep.subr.mxu0 0.0
    %1518 = vmatpush2.msra.mxu0 0.0
    %1519 = vmatprep.subr.mxu0 0.0
    %1520 = vmatpush2.msra.mxu0 0.0
    %1521 = vmatprep.subr.mxu0 0.0
    %1522 = vmatpush2.msra.mxu0 0.0
    %1523 = vmatprep.subr.mxu0 0.0
    %1524 = vmatpush2.msra.mxu0 0.0
    %1525 = vmatprep.subr.mxu0 0.0
    %1526 = vmatpush2.msra.mxu0 0.0
    %1527 = vmatprep.subr.mxu0 0.0
    %1528 = vmatpush2.msra.mxu0 0.0
    %1529 = vmatprep.subr.mxu0 0.0
    %1530 = vmatpush2.msra.mxu0 0.0
    %1531 = vmatprep.subr.mxu0 0.0
    %1532 = vmatpush2.msra.mxu0 0.0
    %1533 = vmatprep.subr.mxu0 0.0
    %1534 = vmatpush2.msra.mxu0 0.0
    %1535 = vmatprep.subr.mxu0 0.0
    %1536 = vmatpush2.msra.mxu0 0.0
    %1537 = vmatprep.mubr.f32.mxu0 0.0
    %1538 = vmatmul.mubr.f32.gmra.mxu0 %v1401
    %v1539 = vpop.f32.mrf.mxu0
    %v1540 = vadd.f32 0.0, %v1539
    %v1541 = vpop.f32.mrf.mxu0
    %v1542 = vadd.f32 0.0, %v1541
    %1543 = vdwg.mxu0
    %v1544 = vadd.f32 %v298, %v1469
    %v1545 = vadd.f32 %v299, %v1471
    %v1546 = vadd.f32 %v300, %v1540
    %v1547 = vadd.f32 %v301, %v1542
    %v1548 = vxor.u32 %v1544, 2147483648
    %v1549 = vmul.f32 %v1548, 1.442695
    %v1550 = vpow.pop %v1549
    %v1551 = vadd.f32 %v1550, 1.0
    %v1552 = vrcp.pop %v1551
    %v1553 = vmul.f32 1.0, %v1552
    %v1554 = vxor.u32 %v1545, 2147483648
    %v1555 = vmul.f32 %v1554, 1.442695
    %v1556 = vpow.pop %v1555
    %v1557 = vadd.f32 %v1556, 1.0
    %v1558 = vrcp.pop %v1557
    %v1559 = vmul.f32 1.0, %v1558
    %v1560 = vtanh.pop %v1546
    %v1561 = vxor.u32 %v1547, 2147483648
    %v1562 = vmul.f32 %v1561, 1.442695
    %v1563 = vpow.pop %v1562
    %v1564 = vadd.f32 %v1563, 1.0
    %v1565 = vrcp.pop %v1564
    %v1566 = vmul.f32 1.0, %v1565
    %v1567 = vmul.f32 %v1559, %v1399
    %v1568 = vmul.f32 %v1553, %v1560
    %v1569 = vadd.f32 %v1567, %v1568
    %v1570 = vtanh.pop %v1569
    %v1571 = vmul.f32 %v1566, %v1570
    %1572 = vst [vmem:[%s4] sm:$0xff] %v1571
    // Predicated region
    $region22: #{lstm_encoder_forward.1} parent=1 // pred_check
      _
    $region23: #{lstm_encoder_forward.1} parent=1 // pred_check_branch
      %1574 = sbr.rel (0) target = $region25
    $region24: #{lstm_encoder_forward.1} parent=1 // pred_region
      _
    $region25: #{lstm_encoder_forward.1} parent=1 // pred_fallthru
      _
    // Predicated region
    $region26: #{lstm_encoder_forward.1} parent=1 // pred_check
      _
    $region27: #{lstm_encoder_forward.1} parent=1 // pred_check_branch
      %1576 = sbr.rel (0) target = $region29
    $region28: #{lstm_encoder_forward.1} parent=1 // pred_region
      _
    $region29: #{lstm_encoder_forward.1} parent=1 // pred_fallthru
      _
    %1577 = vsyncpa [#allocation3], 1

</llo_original>
